<compile_context>
chip_gen: v7x
topology: tpu7x:2x2x1
jax: 0.10.0
libtpu: 0.0.40
codegen_flags: <defaults>
</compile_context>

<pallas_src>
import jax
import jax.numpy as jnp
from jax.experimental import pallas as pl
from jax.experimental.pallas import tpu as pltpu

KS = 7           # spatial-attention kernel size (reference module allows 3 or 7)
PAD = KS // 2    # padding derived from kernel size


def _cbam_kernel(x_ref, w1_ref, w2_ref, t_avg_ref, t_max_ref, out_ref):
    # x_ref: (C, S)   w1_ref: (Cr, C)   w2_ref: (C, Cr)
    # t_avg_ref / t_max_ref: (S, S) Toeplitz conv matrices (taps + boundary masks folded in)
    x = x_ref[...]                                        # (C, S) lane-dense

    # ---------------- channel attention ----------------
    avg = jnp.mean(x, axis=1, keepdims=True)              # (C, 1)  AdaptiveAvgPool3d(1)
    mx = jnp.max(x, axis=1, keepdims=True)                # (C, 1)  AdaptiveMaxPool3d(1)

    def mlp(p):                                           # fc2(relu(fc1(p)))
        h = jnp.maximum(
            jnp.dot(w1_ref[...], p, preferred_element_type=jnp.float32), 0.0)
        return jnp.dot(w2_ref[...], h, preferred_element_type=jnp.float32)

    ca = jax.nn.sigmoid(mlp(avg) + mlp(mx))               # (C, 1)

    # ---------------- spatial attention (Toeplitz MXU formulation) ----------------
    xca = x * ca                                          # channel attention applied
    mean_map = jnp.mean(xca, axis=0, keepdims=True)       # (1, S)
    max_map = jnp.max(xca, axis=0, keepdims=True)         # (1, S)

    # conv[s'] = sum_s mean_map[s]*T_avg[s,s'] + max_map[s]*T_max[s,s']
    conv = (jnp.dot(mean_map, t_avg_ref[...], preferred_element_type=jnp.float32)
            + jnp.dot(max_map, t_max_ref[...], preferred_element_type=jnp.float32))
    att = jax.nn.sigmoid(conv)                            # (1, S)

    # Recompute x*ca at store time instead of keeping xca live across the matmuls.
    out_ref[...] = x_ref[...] * (ca * att)                # lane-dense (C, S) store


def _build_toeplitz(w_sp, D, H, W):
    """Fold the 7x7x7 conv taps and the D/H/W boundary masks into (2, S, S) matrices.

    T[c, s_in, s_out] = w_sp[0, c, d_in-d_out+PAD, h_in-h_out+PAD, w_in-w_out+PAD]
    when all three offsets lie in [0, KS), else 0.
    """
    S = D * H * W
    s = jnp.arange(S)
    d_i = s // (H * W)
    h_i = (s // W) % H
    w_i = s % W
    dd = d_i[:, None] - d_i[None, :] + PAD                # (S_in, S_out)
    dh = h_i[:, None] - h_i[None, :] + PAD
    dw = w_i[:, None] - w_i[None, :] + PAD
    valid = ((dd >= 0) & (dd < KS) & (dh >= 0) & (dh < KS)
             & (dw >= 0) & (dw < KS))
    kidx = jnp.where(valid, (dd * KS + dh) * KS + dw, 0)  # flat tap index
    w_flat = w_sp[0].reshape(2, KS * KS * KS)             # (2, 343)
    return jnp.where(valid[None, :, :], w_flat[:, kidx], 0.0)   # (2, S, S)


def cbam3d(x, w1, w2, w_sp):
    N, C, D, H, W = x.shape
    S = D * H * W
    Cr = w1.shape[0]
    x_flat = x.reshape(N, C, S)                           # free XLA reshape (row-major)

    T = _build_toeplitz(w_sp, D, H, W)                    # (2, S, S), ~2 MiB at S=512
    t_avg, t_max = T[0], T[1]

    out_flat = pl.pallas_call(
        _cbam_kernel,
        out_shape=jax.ShapeDtypeStruct((N, C, S), jnp.float32),
        grid_spec=pltpu.PrefetchScalarGridSpec(
            num_scalar_prefetch=0,
            grid=(N,),
            in_specs=[
                pl.BlockSpec((None, C, S), lambda n: (n, 0, 0)),   # x (per sample)
                pl.BlockSpec((Cr, C), lambda n: (0, 0)),           # fc1 weights
                pl.BlockSpec((C, Cr), lambda n: (0, 0)),           # fc2 weights
                pl.BlockSpec((S, S), lambda n: (0, 0)),            # Toeplitz (avg path)
                pl.BlockSpec((S, S), lambda n: (0, 0)),            # Toeplitz (max path)
            ],
            out_specs=pl.BlockSpec((None, C, S), lambda n: (n, 0, 0)),
        ),
        compiler_params=pltpu.CompilerParams(
            dimension_semantics=("parallel",)),           # megacore over batch (v7x)
    )(x_flat, w1, w2, t_avg, t_max)
    return out_flat.reshape(N, C, D, H, W)


def _cbam3d_reference(x, w1, w2, w_sp):
    # pure-JAX reference mirroring the PyTorch forward
    avg = jnp.mean(x, axis=(2, 3, 4), keepdims=True)
    mx = jnp.max(x, axis=(2, 3, 4), keepdims=True)

    def mlp(p):
        h = jnp.maximum(jnp.einsum('rc,ncxyz->nrxyz', w1, p), 0.0)
        return jnp.einsum('cr,nrxyz->ncxyz', w2, h)

    ca = jax.nn.sigmoid(mlp(avg) + mlp(mx))
    xca = ca * x
    cat = jnp.concatenate([jnp.mean(xca, axis=1, keepdims=True),
                           jnp.max(xca, axis=1, keepdims=True)], axis=1)
    conv = jax.lax.conv_general_dilated(
        cat, w_sp, window_strides=(1, 1, 1),
        padding=[(PAD, PAD)] * 3,
        dimension_numbers=('NCDHW', 'OIDHW', 'NCDHW'))
    sa = jax.nn.sigmoid(conv)
    return sa * xca


if __name__ == "__main__":
    N, C, D, H, W = 2, 32, 8, 8, 8       # in_planes=32, ratio=16 -> hidden=2, S=512
    ratio = 16
    Cr = C // ratio

    key = jax.random.PRNGKey(0)
    kx, k1, k2, k3 = jax.random.split(key, 4)
    x = jax.random.normal(kx, (N, C, D, H, W), jnp.float32)
    w1 = jax.random.normal(k1, (Cr, C), jnp.float32) * 0.1        # fc1: Conv3d(C, C/r, 1)
    w2 = jax.random.normal(k2, (C, Cr), jnp.float32) * 0.1        # fc2: Conv3d(C/r, C, 1)
    w_sp = jax.random.normal(k3, (1, 2, KS, KS, KS), jnp.float32) * 0.05  # Conv3d(2, 1, 7)

    out = jax.jit(cbam3d)(x, w1, w2, w_sp)
    out = jax.block_until_ready(out)

    ref = _cbam3d_reference(x, w1, w2, w_sp)
    assert out.shape == (N, C, D, H, W)
    assert jnp.allclose(out, ref, rtol=1e-3, atol=1e-4), \
        f"max abs err {jnp.max(jnp.abs(out - ref))}"

    print("KERNEL_OK")
</pallas_src>

<mosaic_0001>
module attributes {stable_mosaic.version = 11 : i64} {
  func.func @_cbam_kernel(%arg0: i32, %arg1: memref<1x32x512xf32, #tpu.memory_space<vmem>>, %arg2: memref<2x32xf32, #tpu.memory_space<vmem>>, %arg3: memref<32x2xf32, #tpu.memory_space<vmem>>, %arg4: memref<512x512xf32, #tpu.memory_space<vmem>>, %arg5: memref<512x512xf32, #tpu.memory_space<vmem>>, %arg6: memref<1x32x512xf32, #tpu.memory_space<vmem>>) attributes {dimension_semantics = [#tpu.dimension_semantics<parallel>], iteration_bounds = array<i64: 2>, scalar_prefetch = 0 : i64, scratch_operands = 0 : i64, tpu.core_type = #tpu.core_type<tc>, window_params = [{transform_indices = @transform_0, window_bounds = array<i64: 1, 32, 512>}, {pipeline_mode = #tpu.pipeline_mode<synchronous>, transform_indices = @transform_1, window_bounds = array<i64: 2, 32>}, {pipeline_mode = #tpu.pipeline_mode<synchronous>, transform_indices = @transform_2, window_bounds = array<i64: 32, 2>}, {pipeline_mode = #tpu.pipeline_mode<synchronous>, transform_indices = @transform_3, window_bounds = array<i64: 512, 512>}, {pipeline_mode = #tpu.pipeline_mode<synchronous>, transform_indices = @transform_4, window_bounds = array<i64: 512, 512>}, {transform_indices = @transform_5, window_bounds = array<i64: 1, 32, 512>}]} {
    %c0 = arith.constant 0 : index
    %c0_0 = arith.constant 0 : index
    %c0_1 = arith.constant 0 : index
    %0 = vector.load %arg1[%c0, %c0_0, %c0_1] : memref<1x32x512xf32, #tpu.memory_space<vmem>>, vector<1x32x512xf32>
    %1 = vector.shape_cast %0 : vector<1x32x512xf32> to vector<32x512xf32>
    %cst = arith.constant dense<0.000000e+00> : vector<32xf32>
    %2 = vector.multi_reduction <add>, %1, %cst [1] : vector<32x512xf32> to vector<32xf32>
    %3 = vector.shape_cast %2 : vector<32xf32> to vector<32x1xf32>
    %cst_2 = arith.constant 5.120000e+02 : f32
    %4 = vector.broadcast %cst_2 : f32 to vector<32x1xf32>
    %5 = arith.divf %3, %4 : vector<32x1xf32>
    %cst_3 = arith.constant dense<0xFF800000> : vector<32xf32>
    %6 = vector.multi_reduction <maximumf>, %1, %cst_3 [1] : vector<32x512xf32> to vector<32xf32>
    %7 = vector.shape_cast %6 : vector<32xf32> to vector<32x1xf32>
    %c0_4 = arith.constant 0 : index
    %c0_5 = arith.constant 0 : index
    %8 = vector.load %arg2[%c0_4, %c0_5] : memref<2x32xf32, #tpu.memory_space<vmem>>, vector<2x32xf32>
    %cst_6 = arith.constant dense<0.000000e+00> : vector<2x1xf32>
    %9 = tpu.matmul %8, %5, %cst_6 {dimension_numbers = #tpu.dot_dimension_numbers<[1], [0], [0], [1], [0, 0, 1, 1], [], []>} : vector<2x32xf32>, vector<32x1xf32>, vector<2x1xf32> -> vector<2x1xf32>
    %cst_7 = arith.constant 0.000000e+00 : f32
    %10 = vector.broadcast %cst_7 : f32 to vector<2x1xf32>
    %11 = arith.maximumf %9, %10 : vector<2x1xf32>
    %c0_8 = arith.constant 0 : index
    %c0_9 = arith.constant 0 : index
    %12 = vector.load %arg3[%c0_8, %c0_9] : memref<32x2xf32, #tpu.memory_space<vmem>>, vector<32x2xf32>
    %cst_10 = arith.constant dense<0.000000e+00> : vector<32x1xf32>
    %13 = tpu.matmul %12, %11, %cst_10 {dimension_numbers = #tpu.dot_dimension_numbers<[1], [0], [0], [1], [0, 0, 1, 1], [], []>} : vector<32x2xf32>, vector<2x1xf32>, vector<32x1xf32> -> vector<32x1xf32>
    %c0_11 = arith.constant 0 : index
    %c0_12 = arith.constant 0 : index
    %14 = vector.load %arg2[%c0_11, %c0_12] : memref<2x32xf32, #tpu.memory_space<vmem>>, vector<2x32xf32>
    %cst_13 = arith.constant dense<0.000000e+00> : vector<2x1xf32>
    %15 = tpu.matmul %14, %7, %cst_13 {dimension_numbers = #tpu.dot_dimension_numbers<[1], [0], [0], [1], [0, 0, 1, 1], [], []>} : vector<2x32xf32>, vector<32x1xf32>, vector<2x1xf32> -> vector<2x1xf32>
    %cst_14 = arith.constant 0.000000e+00 : f32
    %16 = vector.broadcast %cst_14 : f32 to vector<2x1xf32>
    %17 = arith.maximumf %15, %16 : vector<2x1xf32>
    %c0_15 = arith.constant 0 : index
    %c0_16 = arith.constant 0 : index
    %18 = vector.load %arg3[%c0_15, %c0_16] : memref<32x2xf32, #tpu.memory_space<vmem>>, vector<32x2xf32>
    %cst_17 = arith.constant dense<0.000000e+00> : vector<32x1xf32>
    %19 = tpu.matmul %18, %17, %cst_17 {dimension_numbers = #tpu.dot_dimension_numbers<[1], [0], [0], [1], [0, 0, 1, 1], [], []>} : vector<32x2xf32>, vector<2x1xf32>, vector<32x1xf32> -> vector<32x1xf32>
    %20 = arith.addf %13, %19 : vector<32x1xf32>
    %21 = arith.negf %20 : vector<32x1xf32>
    %22 = math.exp %21 : vector<32x1xf32>
    %cst_18 = arith.constant 1.000000e+00 : f32
    %23 = vector.broadcast %cst_18 : f32 to vector<32x1xf32>
    %24 = arith.addf %23, %22 : vector<32x1xf32>
    %25 = arith.divf %23, %24 : vector<32x1xf32>
    %26 = vector.broadcast %25 : vector<32x1xf32> to vector<32x512xf32>
    %27 = arith.mulf %1, %26 : vector<32x512xf32>
    %cst_19 = arith.constant dense<0.000000e+00> : vector<512xf32>
    %28 = vector.multi_reduction <add>, %27, %cst_19 [0] : vector<32x512xf32> to vector<512xf32>
    %29 = vector.shape_cast %28 : vector<512xf32> to vector<1x512xf32>
    %cst_20 = arith.constant 3.200000e+01 : f32
    %30 = vector.broadcast %cst_20 : f32 to vector<1x512xf32>
    %31 = arith.divf %29, %30 : vector<1x512xf32>
    %cst_21 = arith.constant dense<0xFF800000> : vector<512xf32>
    %32 = vector.multi_reduction <maximumf>, %27, %cst_21 [0] : vector<32x512xf32> to vector<512xf32>
    %33 = vector.shape_cast %32 : vector<512xf32> to vector<1x512xf32>
    %c0_22 = arith.constant 0 : index
    %c0_23 = arith.constant 0 : index
    %34 = vector.load %arg4[%c0_22, %c0_23] : memref<512x512xf32, #tpu.memory_space<vmem>>, vector<512x512xf32>
    %cst_24 = arith.constant dense<0.000000e+00> : vector<1x512xf32>
    %35 = tpu.matmul %31, %34, %cst_24 {dimension_numbers = #tpu.dot_dimension_numbers<[1], [0], [0], [1], [0, 0, 1, 1], [], []>} : vector<1x512xf32>, vector<512x512xf32>, vector<1x512xf32> -> vector<1x512xf32>
    %c0_25 = arith.constant 0 : index
    %c0_26 = arith.constant 0 : index
    %36 = vector.load %arg5[%c0_25, %c0_26] : memref<512x512xf32, #tpu.memory_space<vmem>>, vector<512x512xf32>
    %cst_27 = arith.constant dense<0.000000e+00> : vector<1x512xf32>
    %37 = tpu.matmul %33, %36, %cst_27 {dimension_numbers = #tpu.dot_dimension_numbers<[1], [0], [0], [1], [0, 0, 1, 1], [], []>} : vector<1x512xf32>, vector<512x512xf32>, vector<1x512xf32> -> vector<1x512xf32>
    %38 = arith.addf %35, %37 : vector<1x512xf32>
    %39 = arith.negf %38 : vector<1x512xf32>
    %40 = math.exp %39 : vector<1x512xf32>
    %cst_28 = arith.constant 1.000000e+00 : f32
    %41 = vector.broadcast %cst_28 : f32 to vector<1x512xf32>
    %42 = arith.addf %41, %40 : vector<1x512xf32>
    %43 = arith.divf %41, %42 : vector<1x512xf32>
    %c0_29 = arith.constant 0 : index
    %c0_30 = arith.constant 0 : index
    %c0_31 = arith.constant 0 : index
    %44 = vector.load %arg1[%c0_29, %c0_30, %c0_31] : memref<1x32x512xf32, #tpu.memory_space<vmem>>, vector<1x32x512xf32>
    %45 = vector.shape_cast %44 : vector<1x32x512xf32> to vector<32x512xf32>
    %46 = vector.broadcast %25 : vector<32x1xf32> to vector<32x512xf32>
    %47 = vector.broadcast %43 : vector<1x512xf32> to vector<32x512xf32>
    %48 = arith.mulf %46, %47 : vector<32x512xf32>
    %49 = arith.mulf %45, %48 : vector<32x512xf32>
    %c0_32 = arith.constant 0 : index
    %c0_33 = arith.constant 0 : index
    %c0_34 = arith.constant 0 : index
    %50 = vector.load %arg6[%c0_32, %c0_33, %c0_34] : memref<1x32x512xf32, #tpu.memory_space<vmem>>, vector<1x32x512xf32>
    %51 = vector.shape_cast %50 : vector<1x32x512xf32> to vector<32x512xf32>
    %52 = vector.shape_cast %49 : vector<32x512xf32> to vector<1x32x512xf32>
    tpu.vector_store %arg6[%c0_32, %c0_33, %c0_34], %52 {strides = array<i32>} : memref<1x32x512xf32, #tpu.memory_space<vmem>>, vector<1x32x512xf32>,
    return
  }
  func.func @transform_0(%arg0: i32) -> (i32, i32, i32) {
    %c0_i32 = arith.constant 0 : i32
    %c0_i32_0 = arith.constant 0 : i32
    %c0_i32_1 = arith.constant 0 : i32
    return %arg0, %c0_i32, %c0_i32_0 : i32, i32, i32
  }
  func.func @transform_1(%arg0: i32) -> (i32, i32) {
    %c0_i32 = arith.constant 0 : i32
    %c0_i32_0 = arith.constant 0 : i32
    %c0_i32_1 = arith.constant 0 : i32
    return %c0_i32, %c0_i32_0 : i32, i32
  }
  func.func @transform_2(%arg0: i32) -> (i32, i32) {
    %c0_i32 = arith.constant 0 : i32
    %c0_i32_0 = arith.constant 0 : i32
    %c0_i32_1 = arith.constant 0 : i32
    return %c0_i32, %c0_i32_0 : i32, i32
  }
  func.func @transform_3(%arg0: i32) -> (i32, i32) {
    %c0_i32 = arith.constant 0 : i32
    %c0_i32_0 = arith.constant 0 : i32
    %c0_i32_1 = arith.constant 0 : i32
    return %c0_i32, %c0_i32_0 : i32, i32
  }
  func.func @transform_4(%arg0: i32) -> (i32, i32) {
    %c0_i32 = arith.constant 0 : i32
    %c0_i32_0 = arith.constant 0 : i32
    %c0_i32_1 = arith.constant 0 : i32
    return %c0_i32, %c0_i32_0 : i32, i32
  }
  func.func @transform_5(%arg0: i32) -> (i32, i32, i32) {
    %c0_i32 = arith.constant 0 : i32
    %c0_i32_0 = arith.constant 0 : i32
    %c0_i32_1 = arith.constant 0 : i32
    return %arg0, %c0_i32, %c0_i32_0 : i32, i32, i32
  }
}

</mosaic_0001>

<llo_original>
// kernel: squeeze.3
$region0: #{squeeze.3}
  %s0 = inlined_call_operand.vmem [shape: f32[1,2,7,7,7], index: 0, kind: input, shape index: {}]
  %s1 = inlined_call_operand.vmem [shape: f32[2,343], index: 1, kind: output, shape index: {}]
  $region1: #{squeeze.3} parent=0
    #allocation0 [shape = 'u8[12288]{0}', space=vmem, size = 0x3000, scoped, tag = 'scoped mem for output reshape']
    %s2 = smov 3
    %v3 = vld [vmem:[%s0] ss:$56 sm:%s2]
    %vm4 = vcmask 56320
    %5 = vst.msk [vmem:[#allocation0] sm:$0x3] %vm4, %v3
    %s6 = scalar_lea.vmem %s0, 20
    %s7 = smov 3
    %v8 = vld [vmem:[%s6] ss:$56 sm:%s7]
    %s9 = scalar_lea.vmem %s0, 20
    %s10 = smov 3
    %v11 = vld [vmem:[%s9] ss:$56 sm:%s10]
    %vm12 = vcmask 15360
    %v13 = vsel %vm12, %v11, %v8
    %14 = vrot.lane.b32.xlu0 %v13, 126
    %v15 = vpop.permute.xlu0 %14
    %vm16 = vcmask 39936
    %s17 = scalar_lea.vmem [#allocation0], 8
    %18 = vst.msk [vmem:[%s17] sm:$0x3] %vm16, %v15
    %vm19 = vcmask 1048560
    %20 = vst.msk [vmem:[#allocation0] sm:$0x3] %vm19, %v15
    %s21 = scalar_lea.vmem %s0, 41
    %s22 = smov 3
    %v23 = vld [vmem:[%s21] ss:$56 sm:%s22]
    %s24 = scalar_lea.vmem %s0, 41
    %s25 = smov 3
    %v26 = vld [vmem:[%s24] ss:$56 sm:%s25]
    %vm27 = vcmask 31744
    %v28 = vsel %vm27, %v26, %v23
    %29 = vrot.lane.b32.xlu0 %v28, 124
    %v30 = vpop.permute.xlu0 %29
    %vm31 = vcmask 23552
    %s32 = scalar_lea.vmem [#allocation0], 16
    %33 = vst.msk [vmem:[%s32] sm:$0x3] %vm31, %v30
    %vm34 = vcmask 1048544
    %s35 = scalar_lea.vmem [#allocation0], 8
    %36 = vst.msk [vmem:[%s35] sm:$0x3] %vm34, %v30
    %s37 = scalar_lea.vmem %s0, 19
    %s38 = smov 3
    %v39 = vld [vmem:[%s37] ss:$56 sm:%s38]
    %40 = vrot.lane.b32.xlu0 %v39, 119
    %v41 = vpop.permute.xlu0 %40
    %vm42 = vcmask 1032120
    %43 = vst.msk [vmem:[#allocation0] sm:$0x3] %vm42, %v41
    %s44 = scalar_lea.vmem %s0, 40
    %s45 = smov 3
    %v46 = vld [vmem:[%s44] ss:$56 sm:%s45]
    %47 = vrot.lane.b32.xlu0 %v46, 117
    %v48 = vpop.permute.xlu0 %47
    %vm49 = vcmask 1015720
    %s50 = scalar_lea.vmem [#allocation0], 8
    %51 = vst.msk [vmem:[%s50] sm:$0x3] %vm49, %v48
    %s52 = scalar_lea.vmem %s0, 18
    %s53 = smov 3
    %v54 = vld [vmem:[%s52] ss:$56 sm:%s53]
    %55 = vrot.lane.b32.xlu0 %v54, 112
    %v56 = vpop.permute.xlu0 %55
    %vm57 = vcmask 974720
    %58 = vst.msk [vmem:[#allocation0] sm:$0x3] %vm57, %v56
    %s59 = scalar_lea.vmem %s0, 38
    %s60 = smov 3
    %v61 = vld [vmem:[%s59] ss:$56 sm:%s60]
    %62 = vrot.lane.b32.xlu0 %v61, 110
    %v63 = vpop.permute.xlu0 %62
    %vm64 = vcmask 958320
    %s65 = scalar_lea.vmem [#allocation0], 8
    %66 = vst.msk [vmem:[%s65] sm:$0x3] %vm64, %v63
    %s67 = scalar_lea.vmem %s0, 17
    %s68 = smov 3
    %v69 = vld [vmem:[%s67] ss:$56 sm:%s68]
    %70 = vrot.lane.b32.xlu0 %v69, 105
    %v71 = vpop.permute.xlu0 %70
    %vm72 = vcmask 917320
    %73 = vst.msk [vmem:[#allocation0] sm:$0x3] %vm72, %v71
    %s74 = scalar_lea.vmem %s0, 37
    %s75 = smov 3
    %v76 = vld [vmem:[%s74] ss:$56 sm:%s75]
    %77 = vrot.lane.b32.xlu0 %v76, 103
    %v78 = vpop.permute.xlu0 %77
    %vm79 = vcmask 900920
    %s80 = scalar_lea.vmem [#allocation0], 8
    %81 = vst.msk [vmem:[%s80] sm:$0x3] %vm79, %v78
    %s82 = scalar_lea.vmem %s0, 16
    %s83 = smov 3
    %v84 = vld [vmem:[%s82] ss:$56 sm:%s83]
    %85 = vrot.lane.b32.xlu0 %v84, 98
    %v86 = vpop.permute.xlu0 %85
    %vm87 = vcmask 859920
    %88 = vst.msk [vmem:[#allocation0] sm:$0x3] %vm87, %v86
    %s89 = scalar_lea.vmem %s0, 36
    %s90 = smov 3
    %v91 = vld [vmem:[%s89] ss:$56 sm:%s90]
    %92 = vrot.lane.b32.xlu0 %v91, 96
    %v93 = vpop.permute.xlu0 %92
    %vm94 = vcmask 843520
    %s95 = scalar_lea.vmem [#allocation0], 8
    %96 = vst.msk [vmem:[%s95] sm:$0x3] %vm94, %v93
    %s97 = scalar_lea.vmem %s0, 14
    %s98 = smov 3
    %v99 = vld [vmem:[%s97] ss:$56 sm:%s98]
    %100 = vrot.lane.b32.xlu0 %v99, 91
    %v101 = vpop.permute.xlu0 %100
    %vm102 = vcmask 802520
    %103 = vst.msk [vmem:[#allocation0] sm:$0x3] %vm102, %v101
    %s104 = scalar_lea.vmem %s0, 35
    %s105 = smov 3
    %v106 = vld [vmem:[%s104] ss:$56 sm:%s105]
    %107 = vrot.lane.b32.xlu0 %v106, 89
    %v108 = vpop.permute.xlu0 %107
    %vm109 = vcmask 786120
    %s110 = scalar_lea.vmem [#allocation0], 8
    %111 = vst.msk [vmem:[%s110] sm:$0x3] %vm109, %v108
    %s112 = scalar_lea.vmem %s0, 13
    %s113 = smov 3
    %v114 = vld [vmem:[%s112] ss:$56 sm:%s113]
    %115 = vrot.lane.b32.xlu0 %v114, 84
    %v116 = vpop.permute.xlu0 %115
    %vm117 = vcmask 745120
    %118 = vst.msk [vmem:[#allocation0] sm:$0x3] %vm117, %v116
    %s119 = scalar_lea.vmem %s0, 34
    %s120 = smov 3
    %v121 = vld [vmem:[%s119] ss:$56 sm:%s120]
    %122 = vrot.lane.b32.xlu0 %v121, 82
    %v123 = vpop.permute.xlu0 %122
    %vm124 = vcmask 728720
    %s125 = scalar_lea.vmem [#allocation0], 8
    %126 = vst.msk [vmem:[%s125] sm:$0x3] %vm124, %v123
    %s127 = scalar_lea.vmem %s0, 54
    %s128 = smov 3
    %v129 = vld [vmem:[%s127] ss:$56 sm:%s128]
    %130 = vrot.lane.b32.xlu0 %v129, 80
    %v131 = vpop.permute.xlu0 %130
    %vm132 = vcmask 712320
    %s133 = scalar_lea.vmem [#allocation0], 16
    %134 = vst.msk [vmem:[%s133] sm:$0x3] %vm132, %v131
    %s135 = scalar_lea.vmem %s0, 12
    %s136 = smov 3
    %v137 = vld [vmem:[%s135] ss:$56 sm:%s136]
    %138 = vrot.lane.b32.xlu0 %v137, 77
    %v139 = vpop.permute.xlu0 %138
    %vm140 = vcmask 687720
    %141 = vst.msk [vmem:[#allocation0] sm:$0x3] %vm140, %v139
    %s142 = scalar_lea.vmem %s0, 33
    %s143 = smov 3
    %v144 = vld [vmem:[%s142] ss:$56 sm:%s143]
    %145 = vrot.lane.b32.xlu0 %v144, 75
    %v146 = vpop.permute.xlu0 %145
    %vm147 = vcmask 671320
    %s148 = scalar_lea.vmem [#allocation0], 8
    %149 = vst.msk [vmem:[%s148] sm:$0x3] %vm147, %v146
    %s150 = scalar_lea.vmem %s0, 53
    %s151 = smov 3
    %v152 = vld [vmem:[%s150] ss:$56 sm:%s151]
    %153 = vrot.lane.b32.xlu0 %v152, 73
    %v154 = vpop.permute.xlu0 %153
    %vm155 = vcmask 654920
    %s156 = scalar_lea.vmem [#allocation0], 16
    %157 = vst.msk [vmem:[%s156] sm:$0x3] %vm155, %v154
    %s158 = scalar_lea.vmem %s0, 11
    %s159 = smov 3
    %v160 = vld [vmem:[%s158] ss:$56 sm:%s159]
    %161 = vrot.lane.b32.xlu0 %v160, 70
    %v162 = vpop.permute.xlu0 %161
    %vm163 = vcmask 630320
    %164 = vst.msk [vmem:[#allocation0] sm:$0x3] %vm163, %v162
    %s165 = scalar_lea.vmem %s0, 32
    %s166 = smov 3
    %v167 = vld [vmem:[%s165] ss:$56 sm:%s166]
    %168 = vrot.lane.b32.xlu0 %v167, 68
    %v169 = vpop.permute.xlu0 %168
    %vm170 = vcmask 613920
    %s171 = scalar_lea.vmem [#allocation0], 8
    %172 = vst.msk [vmem:[%s171] sm:$0x3] %vm170, %v169
    %s173 = scalar_lea.vmem %s0, 52
    %s174 = smov 3
    %v175 = vld [vmem:[%s173] ss:$56 sm:%s174]
    %176 = vrot.lane.b32.xlu0 %v175, 66
    %v177 = vpop.permute.xlu0 %176
    %vm178 = vcmask 597520
    %s179 = scalar_lea.vmem [#allocation0], 16
    %180 = vst.msk [vmem:[%s179] sm:$0x3] %vm178, %v177
    %s181 = scalar_lea.vmem %s0, 10
    %s182 = smov 3
    %v183 = vld [vmem:[%s181] ss:$56 sm:%s182]
    %184 = vrot.lane.b32.xlu0 %v183, 63
    %v185 = vpop.permute.xlu0 %184
    %vm186 = vcmask 572920
    %187 = vst.msk [vmem:[#allocation0] sm:$0x3] %vm186, %v185
    %s188 = scalar_lea.vmem %s0, 30
    %s189 = smov 3
    %v190 = vld [vmem:[%s188] ss:$56 sm:%s189]
    %191 = vrot.lane.b32.xlu0 %v190, 61
    %v192 = vpop.permute.xlu0 %191
    %vm193 = vcmask 556520
    %s194 = scalar_lea.vmem [#allocation0], 8
    %195 = vst.msk [vmem:[%s194] sm:$0x3] %vm193, %v192
    %s196 = scalar_lea.vmem %s0, 51
    %s197 = smov 3
    %v198 = vld [vmem:[%s196] ss:$56 sm:%s197]
    %199 = vrot.lane.b32.xlu0 %v198, 59
    %v200 = vpop.permute.xlu0 %199
    %vm201 = vcmask 540120
    %s202 = scalar_lea.vmem [#allocation0], 16
    %203 = vst.msk [vmem:[%s202] sm:$0x3] %vm201, %v200
    %s204 = scalar_lea.vmem %s0, 9
    %s205 = smov 3
    %v206 = vld [vmem:[%s204] ss:$56 sm:%s205]
    %207 = vrot.lane.b32.xlu0 %v206, 56
    %v208 = vpop.permute.xlu0 %207
    %vm209 = vcmask 515520
    %210 = vst.msk [vmem:[#allocation0] sm:$0x3] %vm209, %v208
    %s211 = scalar_lea.vmem %s0, 29
    %s212 = smov 3
    %v213 = vld [vmem:[%s211] ss:$56 sm:%s212]
    %214 = vrot.lane.b32.xlu0 %v213, 54
    %v215 = vpop.permute.xlu0 %214
    %vm216 = vcmask 499120
    %s217 = scalar_lea.vmem [#allocation0], 8
    %218 = vst.msk [vmem:[%s217] sm:$0x3] %vm216, %v215
    %s219 = scalar_lea.vmem %s0, 50
    %s220 = smov 3
    %v221 = vld [vmem:[%s219] ss:$56 sm:%s220]
    %222 = vrot.lane.b32.xlu0 %v221, 52
    %v223 = vpop.permute.xlu0 %222
    %vm224 = vcmask 482720
    %s225 = scalar_lea.vmem [#allocation0], 16
    %226 = vst.msk [vmem:[%s225] sm:$0x3] %vm224, %v223
    %s227 = scalar_lea.vmem %s0, 8
    %s228 = smov 3
    %v229 = vld [vmem:[%s227] ss:$56 sm:%s228]
    %230 = vrot.lane.b32.xlu0 %v229, 49
    %v231 = vpop.permute.xlu0 %230
    %vm232 = vcmask 458120
    %233 = vst.msk [vmem:[#allocation0] sm:$0x3] %vm232, %v231
    %s234 = scalar_lea.vmem %s0, 28
    %s235 = smov 3
    %v236 = vld [vmem:[%s234] ss:$56 sm:%s235]
    %237 = vrot.lane.b32.xlu0 %v236, 47
    %v238 = vpop.permute.xlu0 %237
    %vm239 = vcmask 441720
    %s240 = scalar_lea.vmem [#allocation0], 8
    %241 = vst.msk [vmem:[%s240] sm:$0x3] %vm239, %v238
    %s242 = scalar_lea.vmem %s0, 49
    %s243 = smov 3
    %v244 = vld [vmem:[%s242] ss:$56 sm:%s243]
    %245 = vrot.lane.b32.xlu0 %v244, 45
    %v246 = vpop.permute.xlu0 %245
    %vm247 = vcmask 425320
    %s248 = scalar_lea.vmem [#allocation0], 16
    %249 = vst.msk [vmem:[%s248] sm:$0x3] %vm247, %v246
    %s250 = scalar_lea.vmem %s0, 6
    %s251 = smov 3
    %v252 = vld [vmem:[%s250] ss:$56 sm:%s251]
    %253 = vrot.lane.b32.xlu0 %v252, 42
    %v254 = vpop.permute.xlu0 %253
    %vm255 = vcmask 400720
    %256 = vst.msk [vmem:[#allocation0] sm:$0x3] %vm255, %v254
    %s257 = scalar_lea.vmem %s0, 27
    %s258 = smov 3
    %v259 = vld [vmem:[%s257] ss:$56 sm:%s258]
    %260 = vrot.lane.b32.xlu0 %v259, 40
    %v261 = vpop.permute.xlu0 %260
    %vm262 = vcmask 384320
    %s263 = scalar_lea.vmem [#allocation0], 8
    %264 = vst.msk [vmem:[%s263] sm:$0x3] %vm262, %v261
    %s265 = scalar_lea.vmem %s0, 48
    %s266 = smov 3
    %v267 = vld [vmem:[%s265] ss:$56 sm:%s266]
    %268 = vrot.lane.b32.xlu0 %v267, 38
    %v269 = vpop.permute.xlu0 %268
    %vm270 = vcmask 367920
    %s271 = scalar_lea.vmem [#allocation0], 16
    %272 = vst.msk [vmem:[%s271] sm:$0x3] %vm270, %v269
    %s273 = scalar_lea.vmem %s0, 5
    %s274 = smov 3
    %v275 = vld [vmem:[%s273] ss:$56 sm:%s274]
    %276 = vrot.lane.b32.xlu0 %v275, 35
    %v277 = vpop.permute.xlu0 %276
    %vm278 = vcmask 343320
    %279 = vst.msk [vmem:[#allocation0] sm:$0x3] %vm278, %v277
    %s280 = scalar_lea.vmem %s0, 26
    %s281 = smov 3
    %v282 = vld [vmem:[%s280] ss:$56 sm:%s281]
    %283 = vrot.lane.b32.xlu0 %v282, 33
    %v284 = vpop.permute.xlu0 %283
    %vm285 = vcmask 326920
    %s286 = scalar_lea.vmem [#allocation0], 8
    %287 = vst.msk [vmem:[%s286] sm:$0x3] %vm285, %v284
    %s288 = scalar_lea.vmem %s0, 46
    %s289 = smov 3
    %v290 = vld [vmem:[%s288] ss:$56 sm:%s289]
    %291 = vrot.lane.b32.xlu0 %v290, 31
    %v292 = vpop.permute.xlu0 %291
    %vm293 = vcmask 310520
    %s294 = scalar_lea.vmem [#allocation0], 16
    %295 = vst.msk [vmem:[%s294] sm:$0x3] %vm293, %v292
    %s296 = scalar_lea.vmem %s0, 4
    %s297 = smov 3
    %v298 = vld [vmem:[%s296] ss:$56 sm:%s297]
    %299 = vrot.lane.b32.xlu0 %v298, 28
    %v300 = vpop.permute.xlu0 %299
    %vm301 = vcmask 285920
    %302 = vst.msk [vmem:[#allocation0] sm:$0x3] %vm301, %v300
    %s303 = scalar_lea.vmem %s0, 25
    %s304 = smov 3
    %v305 = vld [vmem:[%s303] ss:$56 sm:%s304]
    %306 = vrot.lane.b32.xlu0 %v305, 26
    %v307 = vpop.permute.xlu0 %306
    %vm308 = vcmask 269520
    %s309 = scalar_lea.vmem [#allocation0], 8
    %310 = vst.msk [vmem:[%s309] sm:$0x3] %vm308, %v307
    %s311 = scalar_lea.vmem %s0, 45
    %s312 = smov 3
    %v313 = vld [vmem:[%s311] ss:$56 sm:%s312]
    %314 = vrot.lane.b32.xlu0 %v313, 24
    %v315 = vpop.permute.xlu0 %314
    %vm316 = vcmask 253120
    %s317 = scalar_lea.vmem [#allocation0], 16
    %318 = vst.msk [vmem:[%s317] sm:$0x3] %vm316, %v315
    %s319 = scalar_lea.vmem %s0, 3
    %s320 = smov 3
    %v321 = vld [vmem:[%s319] ss:$56 sm:%s320]
    %322 = vrot.lane.b32.xlu0 %v321, 21
    %v323 = vpop.permute.xlu0 %322
    %vm324 = vcmask 228520
    %325 = vst.msk [vmem:[#allocation0] sm:$0x3] %vm324, %v323
    %s326 = scalar_lea.vmem %s0, 24
    %s327 = smov 3
    %v328 = vld [vmem:[%s326] ss:$56 sm:%s327]
    %329 = vrot.lane.b32.xlu0 %v328, 19
    %v330 = vpop.permute.xlu0 %329
    %vm331 = vcmask 212120
    %s332 = scalar_lea.vmem [#allocation0], 8
    %333 = vst.msk [vmem:[%s332] sm:$0x3] %vm331, %v330
    %s334 = scalar_lea.vmem %s0, 44
    %s335 = smov 3
    %v336 = vld [vmem:[%s334] ss:$56 sm:%s335]
    %337 = vrot.lane.b32.xlu0 %v336, 17
    %v338 = vpop.permute.xlu0 %337
    %vm339 = vcmask 195720
    %s340 = scalar_lea.vmem [#allocation0], 16
    %341 = vst.msk [vmem:[%s340] sm:$0x3] %vm339, %v338
    %s342 = scalar_lea.vmem %s0, 2
    %s343 = smov 3
    %v344 = vld [vmem:[%s342] ss:$56 sm:%s343]
    %345 = vrot.lane.b32.xlu0 %v344, 14
    %v346 = vpop.permute.xlu0 %345
    %vm347 = vcmask 171120
    %348 = vst.msk [vmem:[#allocation0] sm:$0x3] %vm347, %v346
    %s349 = scalar_lea.vmem %s0, 22
    %s350 = smov 3
    %v351 = vld [vmem:[%s349] ss:$56 sm:%s350]
    %352 = vrot.lane.b32.xlu0 %v351, 12
    %v353 = vpop.permute.xlu0 %352
    %vm354 = vcmask 154720
    %s355 = scalar_lea.vmem [#allocation0], 8
    %356 = vst.msk [vmem:[%s355] sm:$0x3] %vm354, %v353
    %s357 = scalar_lea.vmem %s0, 43
    %s358 = smov 3
    %v359 = vld [vmem:[%s357] ss:$56 sm:%s358]
    %360 = vrot.lane.b32.xlu0 %v359, 10
    %v361 = vpop.permute.xlu0 %360
    %vm362 = vcmask 138320
    %s363 = scalar_lea.vmem [#allocation0], 16
    %364 = vst.msk [vmem:[%s363] sm:$0x3] %vm362, %v361
    %s365 = scalar_lea.vmem %s0, 1
    %s366 = smov 3
    %v367 = vld [vmem:[%s365] ss:$56 sm:%s366]
    %368 = vrot.lane.b32.xlu0 %v367, 7
    %v369 = vpop.permute.xlu0 %368
    %vm370 = vcmask 113720
    %371 = vst.msk [vmem:[#allocation0] sm:$0x3] %vm370, %v369
    %s372 = scalar_lea.vmem %s0, 21
    %s373 = smov 3
    %v374 = vld [vmem:[%s372] ss:$56 sm:%s373]
    %375 = vrot.lane.b32.xlu0 %v374, 5
    %v376 = vpop.permute.xlu0 %375
    %vm377 = vcmask 97320
    %s378 = scalar_lea.vmem [#allocation0], 8
    %379 = vst.msk [vmem:[%s378] sm:$0x3] %vm377, %v376
    %s380 = scalar_lea.vmem %s0, 42
    %s381 = smov 3
    %v382 = vld [vmem:[%s380] ss:$56 sm:%s381]
    %383 = vrot.lane.b32.xlu0 %v382, 3
    %v384 = vpop.permute.xlu0 %383
    %vm385 = vcmask 80920
    %s386 = scalar_lea.vmem [#allocation0], 16
    %387 = vst.msk [vmem:[%s386] sm:$0x3] %vm385, %v384
    %s389 = sshllo.u32 0, 2
    %v391 = vld [vmem:[#allocation0] sm:%s389]
    %s392 = sshllo.u32 0, 2
    %393 = vst [vmem:[%s1] sm:%s392] %v391
    %s394 = scalar_lea.vmem [#allocation0], 8
    %v395 = vld [vmem:[%s394] sm:%s389]
    %s396 = sshllo.u32 0, 2
    %s397 = scalar_lea.vmem %s1, 2
    %398 = vst [vmem:[%s397] sm:%s396] %v395
    %s399 = scalar_lea.vmem [#allocation0], 16
    %v400 = vld [vmem:[%s399] sm:%s389]
    %s401 = sshllo.u32 0, 2
    %s402 = smul.addr 2, 2
    %s403 = scalar_lea.vmem %s1, %s402
    %404 = vst [vmem:[%s403] sm:%s401] %v400

// kernel: cbam3d.1
$region0: #{cbam3d.1}
  #allocation0 [shape = 'u32[]', space=smem, size = 0x4, offset = 0x4, fixed_abs, tag = 'smem constant byte address 0x4 - core index']
  #allocation1 [shape = 'u32[144,128]{1,0:T(1,128)}', space=vmem, size = 0x12000, scoped, tag = 'internal scratch']
  %s0 = inlined_call_operand.vmem [shape: f32[2,32,512], index: 0, kind: input, shape index: {}]
  %s1 = inlined_call_operand.vmem [shape: f32[2,32], index: 1, kind: input, shape index: {}]
  %s2 = inlined_call_operand.vmem [shape: f32[32,2], index: 2, kind: input, shape index: {}]
  %s3 = inlined_call_operand.vmem [shape: f32[512,512], index: 3, kind: input, shape index: {}]
  %s4 = inlined_call_operand.vmem [shape: f32[512,512], index: 4, kind: input, shape index: {}]
  %s5 = inlined_call_operand.vmem [shape: f32[2,32,512], index: 5, kind: output, shape index: {}]
  %s6 = sld [smem:[#allocation0]]
  $region53: #{cbam3d.1} parent=0
    _
  %s8 = ssub.s32 1, %s6
  %s9 = scalar_select 0, %s8, %s6
  loop: start=0, step=1, limit=4
  $region2: #{cbam3d.1} parent=0 // loop_pre_header
    _
  $region3: #{cbam3d.1} parent=0 // loop_header
    %s11 = sphi 0, %s15
    %p12 = scmp.ge.s32.totalorder %s11, 4
    %s21 = sphi 0, %s23
    %s24 = sphi 0, %s21
    %s25 = sphi 0, %s24
    %s41 = sphi 0, %s25
    %s45 = sphi 0, %s45
    %s47 = sphi 0, %s45
    %s48 = sphi 0, %s47
    %s62 = sphi 0, %s48
    %s66 = sphi 0, %s66
    %s68 = sphi 0, %s66
    %s69 = sphi 0, %s68
    %s83 = sphi 0, %s69
    %s87 = sphi 0, %s87
    %s89 = sphi 0, %s87
    %s90 = sphi 0, %s89
    %s104 = sphi 0, %s90
    %s108 = sphi 0, %s108
    %s110 = sphi 0, %s108
    %s111 = sphi 0, %s110
    %s125 = sphi 0, %s111
    %s131 = sphi 0, %s133
    %s134 = sphi 0, %s131
    %s135 = sphi 0, %s134
    %s151 = sphi 0, %s135
  $region4: #{cbam3d.1} parent=0 // loop_header_branch
    %14 = sbr.rel (%p12) target = $region8
  $region5: #{cbam3d.1} parent=0 // loop_body
    %s16 = ssub.s32 %s11, 1
    %s17 = ssub.s32 %s11, 2
    %s18 = sadd.s32 %s11, 1
    %s19 = ssub.s32 %s11, %s18
    %p20 = scmp.eq.s32.totalorder %s19, 0
    %s22 = sadd.s32 %s21, 1
    %s23 = scalar_select %p20, %s21, %s22
    %p26 = pneg %p20
    %p27 = scmp.eq.s32.totalorder %s11, 1
    %p28 = por %p26, %p27
    %p29 = scmp.ne.s32.totalorder %s21, %s24
    %p30 = scmp.eq.s32.totalorder %s11, 0
    %p31 = por %p29, %p30
    %p32 = scmp.ne.s32.totalorder %s21, %s24
    %p33 = scmp.eq.s32.totalorder %s16, 1
    %p34 = por %p32, %p33
    %p35 = scmp.ne.s32.totalorder %s24, %s25
    %p36 = scmp.eq.s32.totalorder %s16, 0
    %p37 = por %p35, %p36
    %p38 = scmp.ne.s32.totalorder %s24, %s25
    %p39 = scmp.eq.s32.totalorder %s17, 1
    %p40 = por %p38, %p39
    %p42 = scmp.ne.s32.totalorder %s25, %s41
    %p43 = scmp.eq.s32.totalorder %s17, 0
    %p44 = por %p42, %p43
    %s46 = sadd.s32 %s45, 1
    %p49 = scmp.eq.s32.totalorder %s11, 1
    %p50 = scmp.ne.s32.totalorder %s45, %s47
    %p51 = scmp.eq.s32.totalorder %s11, 0
    %p52 = por %p50, %p51
    %p53 = scmp.ne.s32.totalorder %s45, %s47
    %p54 = scmp.eq.s32.totalorder %s16, 1
    %p55 = por %p53, %p54
    %p56 = scmp.ne.s32.totalorder %s47, %s48
    %p57 = scmp.eq.s32.totalorder %s16, 0
    %p58 = por %p56, %p57
    %p59 = scmp.ne.s32.totalorder %s47, %s48
    %p60 = scmp.eq.s32.totalorder %s17, 1
    %p61 = por %p59, %p60
    %p63 = scmp.ne.s32.totalorder %s48, %s62
    %p64 = scmp.eq.s32.totalorder %s17, 0
    %p65 = por %p63, %p64
    %s67 = sadd.s32 %s66, 1
    %p70 = scmp.eq.s32.totalorder %s11, 1
    %p71 = scmp.ne.s32.totalorder %s66, %s68
    %p72 = scmp.eq.s32.totalorder %s11, 0
    %p73 = por %p71, %p72
    %p74 = scmp.ne.s32.totalorder %s66, %s68
    %p75 = scmp.eq.s32.totalorder %s16, 1
    %p76 = por %p74, %p75
    %p77 = scmp.ne.s32.totalorder %s68, %s69
    %p78 = scmp.eq.s32.totalorder %s16, 0
    %p79 = por %p77, %p78
    %p80 = scmp.ne.s32.totalorder %s68, %s69
    %p81 = scmp.eq.s32.totalorder %s17, 1
    %p82 = por %p80, %p81
    %p84 = scmp.ne.s32.totalorder %s69, %s83
    %p85 = scmp.eq.s32.totalorder %s17, 0
    %p86 = por %p84, %p85
    %s88 = sadd.s32 %s87, 1
    %p91 = scmp.eq.s32.totalorder %s11, 1
    %p92 = scmp.ne.s32.totalorder %s87, %s89
    %p93 = scmp.eq.s32.totalorder %s11, 0
    %p94 = por %p92, %p93
    %p95 = scmp.ne.s32.totalorder %s87, %s89
    %p96 = scmp.eq.s32.totalorder %s16, 1
    %p97 = por %p95, %p96
    %p98 = scmp.ne.s32.totalorder %s89, %s90
    %p99 = scmp.eq.s32.totalorder %s16, 0
    %p100 = por %p98, %p99
    %p101 = scmp.ne.s32.totalorder %s89, %s90
    %p102 = scmp.eq.s32.totalorder %s17, 1
    %p103 = por %p101, %p102
    %p105 = scmp.ne.s32.totalorder %s90, %s104
    %p106 = scmp.eq.s32.totalorder %s17, 0
    %p107 = por %p105, %p106
    %s109 = sadd.s32 %s108, 1
    %p112 = scmp.eq.s32.totalorder %s11, 1
    %p113 = scmp.ne.s32.totalorder %s108, %s110
    %p114 = scmp.eq.s32.totalorder %s11, 0
    %p115 = por %p113, %p114
    %p116 = scmp.ne.s32.totalorder %s108, %s110
    %p117 = scmp.eq.s32.totalorder %s16, 1
    %p118 = por %p116, %p117
    %p119 = scmp.ne.s32.totalorder %s110, %s111
    %p120 = scmp.eq.s32.totalorder %s16, 0
    %p121 = por %p119, %p120
    %p122 = scmp.ne.s32.totalorder %s110, %s111
    %p123 = scmp.eq.s32.totalorder %s17, 1
    %p124 = por %p122, %p123
    %p126 = scmp.ne.s32.totalorder %s111, %s125
    %p127 = scmp.eq.s32.totalorder %s17, 0
    %p128 = por %p126, %p127
    %s129 = ssub.s32 %s11, %s18
    %p130 = scmp.eq.s32.totalorder %s129, 0
    %s132 = sadd.s32 %s131, 1
    %s133 = scalar_select %p130, %s131, %s132
    %p136 = pneg %p130
    %p137 = scmp.eq.s32.totalorder %s11, 1
    %p138 = por %p136, %p137
    %p139 = scmp.ne.s32.totalorder %s131, %s134
    %p140 = scmp.eq.s32.totalorder %s11, 0
    %p141 = por %p139, %p140
    %p142 = scmp.ne.s32.totalorder %s131, %s134
    %p143 = scmp.eq.s32.totalorder %s16, 1
    %p144 = por %p142, %p143
    %p145 = scmp.ne.s32.totalorder %s134, %s135
    %p146 = scmp.eq.s32.totalorder %s16, 0
    %p147 = por %p145, %p146
    %p148 = scmp.ne.s32.totalorder %s134, %s135
    %p149 = scmp.eq.s32.totalorder %s17, 1
    %p150 = por %p148, %p149
    %p152 = scmp.ne.s32.totalorder %s135, %s151
    %p153 = scmp.eq.s32.totalorder %s17, 0
    %p154 = por %p152, %p153
    %p155 = scmp.le.s32.totalorder 1, %s11
    %p156 = scmp.lt.s32.totalorder %s11, 3
    %p157 = pnand %p155, %p156
    %p158 = pneg %p157
    // Predicated region
    $region9: #{cbam3d.1} parent=5 // pred_check
      _
    $region10: #{cbam3d.1} parent=5 // pred_check_branch
      %160 = sbr.rel (%p157) target = $region12
    $region11: #{cbam3d.1} parent=5 // pred_region
      %s161 = ssub.s32 %s11, 1
      // Predicated region
      $region13: #{cbam3d.1} parent=11 // pred_check
        %p162 = pneg %p58
      $region14: #{cbam3d.1} parent=11 // pred_check_branch
        %164 = sbr.rel (%p162) target = $region16
      $region15: #{cbam3d.1} parent=11 // pred_region
        _
      $region16: #{cbam3d.1} parent=11 // pred_fallthru
        _
      // Predicated region
      $region17: #{cbam3d.1} parent=11 // pred_check
        %p165 = pneg %p79
      $region18: #{cbam3d.1} parent=11 // pred_check_branch
        %167 = sbr.rel (%p165) target = $region20
      $region19: #{cbam3d.1} parent=11 // pred_region
        _
      $region20: #{cbam3d.1} parent=11 // pred_fallthru
        _
      // Predicated region
      $region21: #{cbam3d.1} parent=11 // pred_check
        %p168 = pneg %p100
      $region22: #{cbam3d.1} parent=11 // pred_check_branch
        %170 = sbr.rel (%p168) target = $region24
      $region23: #{cbam3d.1} parent=11 // pred_region
        _
      $region24: #{cbam3d.1} parent=11 // pred_fallthru
        _
      // Predicated region
      $region25: #{cbam3d.1} parent=11 // pred_check
        %p171 = pneg %p121
      $region26: #{cbam3d.1} parent=11 // pred_check_branch
        %173 = sbr.rel (%p171) target = $region28
      $region27: #{cbam3d.1} parent=11 // pred_region
        _
      $region28: #{cbam3d.1} parent=11 // pred_fallthru
        _
    $region12: #{cbam3d.1} parent=5 // pred_fallthru
      _
    %p174 = scmp.lt.s32.totalorder %s11, 2
    // Predicated region
    $region29: #{cbam3d.1} parent=5 // pred_check
      %p175 = pneg %p174
    $region30: #{cbam3d.1} parent=5 // pred_check_branch
      %177 = sbr.rel (%p175) target = $region32
    $region31: #{cbam3d.1} parent=5 // pred_region
      // Predicated region
      $region33: #{cbam3d.1} parent=31 // pred_check
        %p178 = pneg %p31
      $region34: #{cbam3d.1} parent=31 // pred_check_branch
        %180 = sbr.rel (%p178) target = $region36
      $region35: #{cbam3d.1} parent=31 // pred_region
        %p181 = scmp.lt.s32.totalorder %s11, 1
        %s182 = scalar_select %p181, %s11, 1
        %s183 = smul.addr %s182, 16
        %s184 = smul.addr %s183, 8
        %s185 = scalar_lea.vmem %s0, %s184
      $region36: #{cbam3d.1} parent=31 // pred_fallthru
        _
    $region32: #{cbam3d.1} parent=5 // pred_fallthru
      _
    %p186 = scmp.le.s32.totalorder 1, %s11
    %p187 = scmp.lt.s32.totalorder %s11, 3
    %p188 = pnand %p186, %p187
    %p189 = pneg %p188
    // Predicated region
    $region37: #{cbam3d.1} parent=5 // pred_check
      _
    $region38: #{cbam3d.1} parent=5 // pred_check_branch
      %191 = sbr.rel (%p188) target = $region40
    $region39: #{cbam3d.1} parent=5 // pred_region
      %s192 = ssub.s32 %s11, 1
      %p193 = scmp.lt.s32.totalorder %s16, 1
      %s194 = scalar_select %p193, %s16, 1
      %s195 = smul.addr %s194, 16
      %s196 = smul.addr %s195, 8
      %s197 = scalar_lea.vmem %s0, %s196
      %p198 = pneg %p37
      %p199 = pneg %p34
      %p200 = pneg %p58
      %p201 = pneg %p55
      %p202 = pneg %p79
      %p203 = pneg %p76
      %p204 = pneg %p100
      %p205 = pneg %p97
      %p206 = pneg %p121
      %p207 = pneg %p118
      %p208 = pneg %p147
      %p209 = pneg %p144
      %p210 = scmp.lt.s32.totalorder %s16, 1
      %s211 = scalar_select %p210, %s16, 1
      %s212 = smul.addr %s211, 16
      %s213 = smul.addr %s212, 8
      %s214 = scalar_lea.vmem %s5, %s213
      %p215 = scmp.lt.s32.totalorder %s16, 1
      %s216 = scalar_select %p215, %s16, 1
      %s217 = smul.addr %s216, 16
      %s218 = smul.addr %s217, 8
      %s219 = scalar_lea.vmem %s0, %s218
      %p220 = scmp.lt.s32.totalorder %s16, 1
      %s221 = scalar_select %p220, %s16, 1
      %s222 = smul.addr %s221, 16
      %s223 = smul.addr %s222, 8
      %s224 = scalar_lea.vmem %s5, %s223
      %v225 = vld [vmem:[%s219] sm:$0xff]
      %v226 = vld [vmem:[%s219 + $0x8] sm:$0xff]
      %v227 = vld [vmem:[%s219 + $0x10] sm:$0xff]
      %v228 = vld [vmem:[%s219 + $0x18] sm:$0xff]
      %v229 = vld [vmem:[%s219 + $0x20] sm:$0xff]
      %v230 = vld [vmem:[%s219 + $0x28] sm:$0xff]
      %v231 = vld [vmem:[%s219 + $0x30] sm:$0xff]
      %v232 = vld [vmem:[%s219 + $0x38] sm:$0xff]
      %v233 = vld [vmem:[%s219 + $0x40] sm:$0xff]
      %v234 = vld [vmem:[%s219 + $0x48] sm:$0xff]
      %v235 = vld [vmem:[%s219 + $0x50] sm:$0xff]
      %v236 = vld [vmem:[%s219 + $0x58] sm:$0xff]
      %v237 = vld [vmem:[%s219 + $0x60] sm:$0xff]
      %v238 = vld [vmem:[%s219 + $0x68] sm:$0xff]
      %v239 = vld [vmem:[%s219 + $0x70] sm:$0xff]
      %v240 = vld [vmem:[%s219 + $0x78] sm:$0xff]
      %v241 = vadd.f32 %v225, %v226
      %v242 = vadd.f32 %v241, %v227
      %v243 = vadd.f32 %v242, %v228
      %244 = vadd.xlane.f32.xlu0 %v243
      %v245 = vpop.xlane.xlu0 %244
      %v246 = vadd.f32 %v229, %v230
      %v247 = vadd.f32 %v246, %v231
      %v248 = vadd.f32 %v247, %v232
      %249 = vadd.xlane.f32.xlu0 %v248
      %v250 = vpop.xlane.xlu0 %249
      %v251 = vadd.f32 %v233, %v234
      %v252 = vadd.f32 %v251, %v235
      %v253 = vadd.f32 %v252, %v236
      %254 = vadd.xlane.f32.xlu0 %v253
      %v255 = vpop.xlane.xlu0 %254
      %v256 = vadd.f32 %v237, %v238
      %v257 = vadd.f32 %v256, %v239
      %v258 = vadd.f32 %v257, %v240
      %259 = vadd.xlane.f32.xlu0 %v258
      %v260 = vpop.xlane.xlu0 %259
      %v261 = vrcp.pop 512.0
      %v262 = vmul.f32 %v245, %v261
      %v263 = vmul.f32 %v250, %v261
      %v264 = vmul.f32 %v255, %v261
      %v265 = vmul.f32 %v260, %v261
      %v266 = vmax.f32 %v225, %v226
      %v267 = vmax.f32 %v266, %v227
      %v268 = vmax.f32 %v267, %v228
      %269 = vmax.xlane.f32.xlu0 %v268
      %v270 = vpop.xlane.xlu0 %269
      %v271 = vmax.f32 %v229, %v230
      %v272 = vmax.f32 %v271, %v231
      %v273 = vmax.f32 %v272, %v232
      %274 = vmax.xlane.f32.xlu0 %v273
      %v275 = vpop.xlane.xlu0 %274
      %v276 = vmax.f32 %v233, %v234
      %v277 = vmax.f32 %v276, %v235
      %v278 = vmax.f32 %v277, %v236
      %279 = vmax.xlane.f32.xlu0 %v278
      %v280 = vpop.xlane.xlu0 %279
      %v281 = vmax.f32 %v237, %v238
      %v282 = vmax.f32 %v281, %v239
      %v283 = vmax.f32 %v282, %v240
      %284 = vmax.xlane.f32.xlu0 %v283
      %v285 = vpop.xlane.xlu0 %284
      %v286 = vld [vmem:[%s1] sm:$0x3]
      %vm287 = vcmask 261120
      %v289 = vsel %vm287, %v286, 0
      %291 = vmatprep.subr.mxu0 0.0
      %292 = vmatpush1.msra.mxu0 %v262
      %293 = vmatprep.subr.mxu0 0.0
      %294 = vmatpush1.msra.mxu0 %v263
      %295 = vmatprep.subr.mxu0 0.0
      %296 = vmatpush1.msra.mxu0 %v264
      %297 = vmatprep.subr.mxu0 0.0
      %298 = vmatpush1.msra.mxu0 %v265
      %299 = vmatprep.subr.mxu0 0.0
      %300 = vmatpush1.msra.mxu0 0.0
      %301 = vmatprep.subr.mxu0 0.0
      %302 = vmatpush1.msra.mxu0 0.0
      %303 = vmatprep.subr.mxu0 0.0
      %304 = vmatpush1.msra.mxu0 0.0
      %305 = vmatprep.subr.mxu0 0.0
      %306 = vmatpush1.msra.mxu0 0.0
      %307 = vmatprep.subr.mxu0 0.0
      %308 = vmatpush1.msra.mxu0 0.0
      %309 = vmatprep.subr.mxu0 0.0
      %310 = vmatpush1.msra.mxu0 0.0
      %311 = vmatprep.subr.mxu0 0.0
      %312 = vmatpush1.msra.mxu0 0.0
      %313 = vmatprep.subr.mxu0 0.0
      %314 = vmatpush1.msra.mxu0 0.0
      %315 = vmatprep.subr.mxu0 0.0
      %316 = vmatpush1.msra.mxu0 0.0
      %317 = vmatprep.subr.mxu0 0.0
      %318 = vmatpush1.msra.mxu0 0.0
      %319 = vmatprep.subr.mxu0 0.0
      %320 = vmatpush1.msra.mxu0 0.0
      %321 = vmatprep.subr.mxu0 0.0
      %322 = vmatpush1.msra.mxu0 0.0
      %323 = vmatprep.subr.mxu0 0.0
      %324 = vmatpush1.msra.mxu0 0.0
      %325 = vmatprep.subr.mxu0 0.0
      %326 = vmatpush1.msra.mxu0 0.0
      %327 = vmatprep.subr.mxu0 0.0
      %328 = vmatpush1.msra.mxu0 0.0
      %329 = vmatprep.subr.mxu0 0.0
      %330 = vmatpush1.msra.mxu0 0.0
      %331 = vmatprep.subr.mxu0 0.0
      %332 = vmatpush1.msra.mxu0 0.0
      %333 = vmatprep.subr.mxu0 0.0
      %334 = vmatpush1.msra.mxu0 0.0
      %335 = vmatprep.subr.mxu0 0.0
      %336 = vmatpush1.msra.mxu0 0.0
      %337 = vmatprep.subr.mxu0 0.0
      %338 = vmatpush1.msra.mxu0 0.0
      %339 = vmatprep.subr.mxu0 0.0
      %340 = vmatpush1.msra.mxu0 0.0
      %341 = vmatprep.subr.mxu0 0.0
      %342 = vmatpush1.msra.mxu0 0.0
      %343 = vmatprep.subr.mxu0 0.0
      %344 = vmatpush1.msra.mxu0 0.0
      %345 = vmatprep.subr.mxu0 0.0
      %346 = vmatpush1.msra.mxu0 0.0
      %347 = vmatprep.subr.mxu0 0.0
      %348 = vmatpush1.msra.mxu0 0.0
      %349 = vmatprep.subr.mxu0 0.0
      %350 = vmatpush1.msra.mxu0 0.0
      %351 = vmatprep.subr.mxu0 0.0
      %352 = vmatpush1.msra.mxu0 0.0
      %353 = vmatprep.subr.mxu0 0.0
      %354 = vmatpush1.msra.mxu0 0.0
      %355 = vmatprep.mubr.f32.mxu0 0.0
      %356 = vmatmul.mubr.f32.gmra.mrb[0].mxu0 %v289
      %v357 = vpop.f32.mrb[0].mxu0
      %v358 = vadd.f32 0.0, %v357
      %v359 = vpop.f32.mrb[0].mxu0
      %360 = vdwg.mxu0
      %v361 = vmax.f32 %v358, 0.0
      %v362 = vld [vmem:[%s2] sm:$0xff]
      %v363 = vld [vmem:[%s2 + $0x8] sm:$0xff]
      %v364 = vld [vmem:[%s2 + $0x10] sm:$0xff]
      %v365 = vld [vmem:[%s2 + $0x18] sm:$0xff]
      %366 = vmatprep.subr.mxu0 0.0
      %367 = vmatpush1.msra.mxu0 %v270
      %368 = vmatprep.subr.mxu0 0.0
      %369 = vmatpush1.msra.mxu0 %v275
      %370 = vmatprep.subr.mxu0 0.0
      %371 = vmatpush1.msra.mxu0 %v280
      %372 = vmatprep.subr.mxu0 0.0
      %373 = vmatpush1.msra.mxu0 %v285
      %374 = vmatprep.subr.mxu0 0.0
      %375 = vmatpush1.msra.mxu0 0.0
      %376 = vmatprep.subr.mxu0 0.0
      %377 = vmatpush1.msra.mxu0 0.0
      %378 = vmatprep.subr.mxu0 0.0
      %379 = vmatpush1.msra.mxu0 0.0
      %380 = vmatprep.subr.mxu0 0.0
      %381 = vmatpush1.msra.mxu0 0.0
      %382 = vmatprep.subr.mxu0 0.0
      %383 = vmatpush1.msra.mxu0 0.0
      %384 = vmatprep.subr.mxu0 0.0
      %385 = vmatpush1.msra.mxu0 0.0
      %386 = vmatprep.subr.mxu0 0.0
      %387 = vmatpush1.msra.mxu0 0.0
      %388 = vmatprep.subr.mxu0 0.0
      %389 = vmatpush1.msra.mxu0 0.0
      %390 = vmatprep.subr.mxu0 0.0
      %391 = vmatpush1.msra.mxu0 0.0
      %392 = vmatprep.subr.mxu0 0.0
      %393 = vmatpush1.msra.mxu0 0.0
      %394 = vmatprep.subr.mxu0 0.0
      %395 = vmatpush1.msra.mxu0 0.0
      %396 = vmatprep.subr.mxu0 0.0
      %397 = vmatpush1.msra.mxu0 0.0
      %398 = vmatprep.subr.mxu0 0.0
      %399 = vmatpush1.msra.mxu0 0.0
      %400 = vmatprep.subr.mxu0 0.0
      %401 = vmatpush1.msra.mxu0 0.0
      %402 = vmatprep.subr.mxu0 0.0
      %403 = vmatpush1.msra.mxu0 0.0
      %404 = vmatprep.subr.mxu0 0.0
      %405 = vmatpush1.msra.mxu0 0.0
      %406 = vmatprep.subr.mxu0 0.0
      %407 = vmatpush1.msra.mxu0 0.0
      %408 = vmatprep.subr.mxu0 0.0
      %409 = vmatpush1.msra.mxu0 0.0
      %410 = vmatprep.subr.mxu0 0.0
      %411 = vmatpush1.msra.mxu0 0.0
      %412 = vmatprep.subr.mxu0 0.0
      %413 = vmatpush1.msra.mxu0 0.0
      %414 = vmatprep.subr.mxu0 0.0
      %415 = vmatpush1.msra.mxu0 0.0
      %416 = vmatprep.subr.mxu0 0.0
      %417 = vmatpush1.msra.mxu0 0.0
      %418 = vmatprep.subr.mxu0 0.0
      %419 = vmatpush1.msra.mxu0 0.0
      %420 = vmatprep.subr.mxu0 0.0
      %421 = vmatpush1.msra.mxu0 0.0
      %422 = vmatprep.subr.mxu0 0.0
      %423 = vmatpush1.msra.mxu0 0.0
      %424 = vmatprep.subr.mxu0 0.0
      %425 = vmatpush1.msra.mxu0 0.0
      %426 = vmatprep.subr.mxu0 0.0
      %427 = vmatpush1.msra.mxu0 0.0
      %428 = vmatprep.subr.mxu0 0.0
      %429 = vmatpush1.msra.mxu0 0.0
      %430 = vmatprep.mubr.f32.mxu0 0.0
      %431 = vmatmul.mubr.f32.gmra.mrb[0].mxu0 %v289
      %v432 = vpop.f32.mrb[0].mxu0
      %v433 = vadd.f32 0.0, %v432
      %v434 = vpop.f32.mrb[0].mxu0
      %435 = vdwg.mxu0
      %v436 = vmax.f32 %v433, 0.0
      %vm437 = vcmask 15360
      %v439 = vsel %vm437, %v362, 0
      %v442 = vsel %vm437, %v363, 0
      %v445 = vsel %vm437, %v364, 0
      %v448 = vsel %vm437, %v365, 0
      %vm450 = vcmask 1041408
      %v452 = vsel %vm450, %v436, 0
      %454 = vmatprep.subr.mxu0 0.0
      %455 = vmatpush1.msra.mxu0 %v452
      %456 = vmatprep.subr.mxu0 0.0
      %457 = vmatpush1.msra.mxu0 0.0
      %458 = vmatprep.subr.mxu0 0.0
      %459 = vmatpush1.msra.mxu0 0.0
      %460 = vmatprep.subr.mxu0 0.0
      %461 = vmatpush1.msra.mxu0 0.0
      %462 = vmatprep.subr.mxu0 0.0
      %463 = vmatpush1.msra.mxu0 0.0
      %464 = vmatprep.subr.mxu0 0.0
      %465 = vmatpush1.msra.mxu0 0.0
      %466 = vmatprep.subr.mxu0 0.0
      %467 = vmatpush1.msra.mxu0 0.0
      %468 = vmatprep.subr.mxu0 0.0
      %469 = vmatpush1.msra.mxu0 0.0
      %470 = vmatprep.subr.mxu0 0.0
      %471 = vmatpush1.msra.mxu0 0.0
      %472 = vmatprep.subr.mxu0 0.0
      %473 = vmatpush1.msra.mxu0 0.0
      %474 = vmatprep.subr.mxu0 0.0
      %475 = vmatpush1.msra.mxu0 0.0
      %476 = vmatprep.subr.mxu0 0.0
      %477 = vmatpush1.msra.mxu0 0.0
      %478 = vmatprep.subr.mxu0 0.0
      %479 = vmatpush1.msra.mxu0 0.0
      %480 = vmatprep.subr.mxu0 0.0
      %481 = vmatpush1.msra.mxu0 0.0
      %482 = vmatprep.subr.mxu0 0.0
      %483 = vmatpush1.msra.mxu0 0.0
      %484 = vmatprep.subr.mxu0 0.0
      %485 = vmatpush1.msra.mxu0 0.0
      %486 = vmatprep.subr.mxu0 0.0
      %487 = vmatpush1.msra.mxu0 0.0
      %488 = vmatprep.subr.mxu0 0.0
      %489 = vmatpush1.msra.mxu0 0.0
      %490 = vmatprep.subr.mxu0 0.0
      %491 = vmatpush1.msra.mxu0 0.0
      %492 = vmatprep.subr.mxu0 0.0
      %493 = vmatpush1.msra.mxu0 0.0
      %494 = vmatprep.subr.mxu0 0.0
      %495 = vmatpush1.msra.mxu0 0.0
      %496 = vmatprep.subr.mxu0 0.0
      %497 = vmatpush1.msra.mxu0 0.0
      %498 = vmatprep.subr.mxu0 0.0
      %499 = vmatpush1.msra.mxu0 0.0
      %500 = vmatprep.subr.mxu0 0.0
      %501 = vmatpush1.msra.mxu0 0.0
      %502 = vmatprep.subr.mxu0 0.0
      %503 = vmatpush1.msra.mxu0 0.0
      %504 = vmatprep.subr.mxu0 0.0
      %505 = vmatpush1.msra.mxu0 0.0
      %506 = vmatprep.subr.mxu0 0.0
      %507 = vmatpush1.msra.mxu0 0.0
      %508 = vmatprep.subr.mxu0 0.0
      %509 = vmatpush1.msra.mxu0 0.0
      %510 = vmatprep.subr.mxu0 0.0
      %511 = vmatpush1.msra.mxu0 0.0
      %512 = vmatprep.subr.mxu0 0.0
      %513 = vmatpush1.msra.mxu0 0.0
      %514 = vmatprep.subr.mxu0 0.0
      %515 = vmatpush1.msra.mxu0 0.0
      %516 = vmatprep.subr.mxu0 0.0
      %517 = vmatpush1.msra.mxu0 0.0
      %518 = vmatprep.mubr.f32.mxu0 0.0
      %519 = vmatmul.mubr.f32.gmra.mrb[0].mxu0 %v439
      %v520 = vpop.f32.mrb[0].mxu0
      %v521 = vadd.f32 0.0, %v520
      %v522 = vpop.f32.mrb[0].mxu0
      %523 = vmatprep.mubr.f32.mxu0 0.0
      %524 = vmatmul.mubr.f32.gmra.mrb[0].mxu0 %v442
      %v525 = vpop.f32.mrb[0].mxu0
      %v526 = vadd.f32 0.0, %v525
      %v527 = vpop.f32.mrb[0].mxu0
      %528 = vmatprep.mubr.f32.mxu0 0.0
      %529 = vmatmul.mubr.f32.gmra.mrb[0].mxu0 %v445
      %v530 = vpop.f32.mrb[0].mxu0
      %v531 = vadd.f32 0.0, %v530
      %v532 = vpop.f32.mrb[0].mxu0
      %533 = vmatprep.mubr.f32.mxu0 0.0
      %534 = vmatmul.mubr.f32.gmra.mrb[0].mxu0 %v448
      %v535 = vpop.f32.mrb[0].mxu0
      %v536 = vadd.f32 0.0, %v535
      %v537 = vpop.f32.mrb[0].mxu0
      %538 = vdwg.mxu0
      %v540 = vsel %vm450, %v361, 0
      %542 = vmatprep.subr.mxu0 0.0
      %543 = vmatpush1.msra.mxu0 %v540
      %544 = vmatprep.subr.mxu0 0.0
      %545 = vmatpush1.msra.mxu0 0.0
      %546 = vmatprep.subr.mxu0 0.0
      %547 = vmatpush1.msra.mxu0 0.0
      %548 = vmatprep.subr.mxu0 0.0
      %549 = vmatpush1.msra.mxu0 0.0
      %550 = vmatprep.subr.mxu0 0.0
      %551 = vmatpush1.msra.mxu0 0.0
      %552 = vmatprep.subr.mxu0 0.0
      %553 = vmatpush1.msra.mxu0 0.0
      %554 = vmatprep.subr.mxu0 0.0
      %555 = vmatpush1.msra.mxu0 0.0
      %556 = vmatprep.subr.mxu0 0.0
      %557 = vmatpush1.msra.mxu0 0.0
      %558 = vmatprep.subr.mxu0 0.0
      %559 = vmatpush1.msra.mxu0 0.0
      %560 = vmatprep.subr.mxu0 0.0
      %561 = vmatpush1.msra.mxu0 0.0
      %562 = vmatprep.subr.mxu0 0.0
      %563 = vmatpush1.msra.mxu0 0.0
      %564 = vmatprep.subr.mxu0 0.0
      %565 = vmatpush1.msra.mxu0 0.0
      %566 = vmatprep.subr.mxu0 0.0
      %567 = vmatpush1.msra.mxu0 0.0
      %568 = vmatprep.subr.mxu0 0.0
      %569 = vmatpush1.msra.mxu0 0.0
      %570 = vmatprep.subr.mxu0 0.0
      %571 = vmatpush1.msra.mxu0 0.0
      %572 = vmatprep.subr.mxu0 0.0
      %573 = vmatpush1.msra.mxu0 0.0
      %574 = vmatprep.subr.mxu0 0.0
      %575 = vmatpush1.msra.mxu0 0.0
      %576 = vmatprep.subr.mxu0 0.0
      %577 = vmatpush1.msra.mxu0 0.0
      %578 = vmatprep.subr.mxu0 0.0
      %579 = vmatpush1.msra.mxu0 0.0
      %580 = vmatprep.subr.mxu0 0.0
      %581 = vmatpush1.msra.mxu0 0.0
      %582 = vmatprep.subr.mxu0 0.0
      %583 = vmatpush1.msra.mxu0 0.0
      %584 = vmatprep.subr.mxu0 0.0
      %585 = vmatpush1.msra.mxu0 0.0
      %586 = vmatprep.subr.mxu0 0.0
      %587 = vmatpush1.msra.mxu0 0.0
      %588 = vmatprep.subr.mxu0 0.0
      %589 = vmatpush1.msra.mxu0 0.0
      %590 = vmatprep.subr.mxu0 0.0
      %591 = vmatpush1.msra.mxu0 0.0
      %592 = vmatprep.subr.mxu0 0.0
      %593 = vmatpush1.msra.mxu0 0.0
      %594 = vmatprep.subr.mxu0 0.0
      %595 = vmatpush1.msra.mxu0 0.0
      %596 = vmatprep.subr.mxu0 0.0
      %597 = vmatpush1.msra.mxu0 0.0
      %598 = vmatprep.subr.mxu0 0.0
      %599 = vmatpush1.msra.mxu0 0.0
      %600 = vmatprep.subr.mxu0 0.0
      %601 = vmatpush1.msra.mxu0 0.0
      %602 = vmatprep.subr.mxu0 0.0
      %603 = vmatpush1.msra.mxu0 0.0
      %604 = vmatprep.subr.mxu0 0.0
      %605 = vmatpush1.msra.mxu0 0.0
      %606 = vmatprep.mubr.f32.mxu0 0.0
      %607 = vmatmul.mubr.f32.gmra.mrb[0].mxu0 %v439
      %v608 = vpop.f32.mrb[0].mxu0
      %v609 = vadd.f32 %v521, %v608
      %v610 = vpop.f32.mrb[0].mxu0
      %611 = vmatprep.mubr.f32.mxu0 0.0
      %612 = vmatmul.mubr.f32.gmra.mrb[0].mxu0 %v442
      %v613 = vpop.f32.mrb[0].mxu0
      %v614 = vadd.f32 %v526, %v613
      %v615 = vpop.f32.mrb[0].mxu0
      %616 = vmatprep.mubr.f32.mxu0 0.0
      %617 = vmatmul.mubr.f32.gmra.mrb[0].mxu0 %v445
      %v618 = vpop.f32.mrb[0].mxu0
      %v619 = vadd.f32 %v531, %v618
      %v620 = vpop.f32.mrb[0].mxu0
      %621 = vmatprep.mubr.f32.mxu0 0.0
      %622 = vmatmul.mubr.f32.gmra.mrb[0].mxu0 %v448
      %v623 = vpop.f32.mrb[0].mxu0
      %v624 = vadd.f32 %v536, %v623
      %v625 = vpop.f32.mrb[0].mxu0
      %626 = vdwg.mxu0
      %v627 = vxor.u32 %v609, 2147483648
      %v628 = vxor.u32 %v614, 2147483648
      %v629 = vxor.u32 %v619, 2147483648
      %v630 = vxor.u32 %v624, 2147483648
      %v631 = vmul.f32 %v627, 1.442695
      %v632 = vpow.pop %v631
      %v633 = vmul.f32 %v628, 1.442695
      %v634 = vpow.pop %v633
      %v635 = vmul.f32 %v629, 1.442695
      %v636 = vpow.pop %v635
      %v637 = vmul.f32 %v630, 1.442695
      %v638 = vpow.pop %v637
      %v639 = vadd.f32 %v632, 1.0
      %v640 = vadd.f32 %v634, 1.0
      %v641 = vadd.f32 %v636, 1.0
      %v642 = vadd.f32 %v638, 1.0
      %v643 = vrcp.pop %v639
      %v644 = vmul.f32 1.0, %v643
      %v645 = vrcp.pop %v640
      %v646 = vmul.f32 1.0, %v645
      %v647 = vrcp.pop %v641
      %v648 = vmul.f32 1.0, %v647
      %v649 = vrcp.pop %v642
      %v650 = vmul.f32 1.0, %v649
      %652 = vset.pattern.permute.xlu0 0
      %653 = vperm.xlu0 %652, %v644
      %v654 = vpop.permute.xlu0 %653
      %657 = vset.pattern.permute.xlu0 0
      %658 = vperm.xlu0 %657, %v646
      %v659 = vpop.permute.xlu0 %658
      %662 = vset.pattern.permute.xlu0 0
      %663 = vperm.xlu0 %662, %v648
      %v664 = vpop.permute.xlu0 %663
      %667 = vset.pattern.permute.xlu0 0
      %668 = vperm.xlu0 %667, %v650
      %v669 = vpop.permute.xlu0 %668
      %v671 = vmul.f32 %v225, %v654
      %v672 = vmul.f32 %v226, %v654
      %v673 = vmul.f32 %v227, %v654
      %v674 = vmul.f32 %v228, %v654
      %v675 = vmul.f32 %v229, %v659
      %v676 = vmul.f32 %v230, %v659
      %v677 = vmul.f32 %v231, %v659
      %v678 = vmul.f32 %v232, %v659
      %v679 = vmul.f32 %v233, %v664
      %v680 = vmul.f32 %v234, %v664
      %v681 = vmul.f32 %v235, %v664
      %v682 = vmul.f32 %v236, %v664
      %v683 = vmul.f32 %v237, %v669
      %v684 = vmul.f32 %v238, %v669
      %v685 = vmul.f32 %v239, %v669
      %v686 = vmul.f32 %v240, %v669
      %v687 = vadd.f32 %v671, %v675
      %v688 = vadd.f32 %v687, %v679
      %v689 = vadd.f32 %v688, %v683
      %v690 = vrot.slane %v689, 4
      %v691 = vadd.f32 %v689, %v690
      %v692 = vrot.slane %v691, 2
      %v693 = vadd.f32 %v691, %v692
      %v694 = vrot.slane %v693, 1
      %v695 = vadd.f32 %v693, %v694
      %v696 = vadd.f32 %v672, %v676
      %v697 = vadd.f32 %v696, %v680
      %v698 = vadd.f32 %v697, %v684
      %v699 = vrot.slane %v698, 4
      %v700 = vadd.f32 %v698, %v699
      %v701 = vrot.slane %v700, 2
      %v702 = vadd.f32 %v700, %v701
      %v703 = vrot.slane %v702, 1
      %v704 = vadd.f32 %v702, %v703
      %v705 = vadd.f32 %v673, %v677
      %v706 = vadd.f32 %v705, %v681
      %v707 = vadd.f32 %v706, %v685
      %v708 = vrot.slane %v707, 4
      %v709 = vadd.f32 %v707, %v708
      %v710 = vrot.slane %v709, 2
      %v711 = vadd.f32 %v709, %v710
      %v712 = vrot.slane %v711, 1
      %v713 = vadd.f32 %v711, %v712
      %v714 = vadd.f32 %v674, %v678
      %v715 = vadd.f32 %v714, %v682
      %v716 = vadd.f32 %v715, %v686
      %v717 = vrot.slane %v716, 4
      %v718 = vadd.f32 %v716, %v717
      %v719 = vrot.slane %v718, 2
      %v720 = vadd.f32 %v718, %v719
      %v721 = vrot.slane %v720, 1
      %v722 = vadd.f32 %v720, %v721
      %v723 = vrcp.pop 32.0
      %v724 = vmul.f32 %v695, %v723
      %v725 = vmul.f32 %v704, %v723
      %v726 = vmul.f32 %v713, %v723
      %v727 = vmul.f32 %v722, %v723
      %v728 = vmax.f32 %v671, %v675
      %v729 = vmax.f32 %v728, %v679
      %v730 = vmax.f32 %v729, %v683
      %v731 = vrot.slane %v730, 4
      %v732 = vmax.f32 %v730, %v731
      %v733 = vrot.slane %v732, 2
      %v734 = vmax.f32 %v732, %v733
      %v735 = vrot.slane %v734, 1
      %v736 = vmax.f32 %v734, %v735
      %v737 = vmax.f32 %v672, %v676
      %v738 = vmax.f32 %v737, %v680
      %v739 = vmax.f32 %v738, %v684
      %v740 = vrot.slane %v739, 4
      %v741 = vmax.f32 %v739, %v740
      %v742 = vrot.slane %v741, 2
      %v743 = vmax.f32 %v741, %v742
      %v744 = vrot.slane %v743, 1
      %v745 = vmax.f32 %v743, %v744
      %v746 = vmax.f32 %v673, %v677
      %v747 = vmax.f32 %v746, %v681
      %v748 = vmax.f32 %v747, %v685
      %v749 = vrot.slane %v748, 4
      %v750 = vmax.f32 %v748, %v749
      %v751 = vrot.slane %v750, 2
      %v752 = vmax.f32 %v750, %v751
      %v753 = vrot.slane %v752, 1
      %v754 = vmax.f32 %v752, %v753
      %v755 = vmax.f32 %v674, %v678
      %v756 = vmax.f32 %v755, %v682
      %v757 = vmax.f32 %v756, %v686
      %v758 = vrot.slane %v757, 4
      %v759 = vmax.f32 %v757, %v758
      %v760 = vrot.slane %v759, 2
      %v761 = vmax.f32 %v759, %v760
      %v762 = vrot.slane %v761, 1
      %v763 = vmax.f32 %v761, %v762
      %v764 = vld [vmem:[%s3] sm:$0xff]
      %v765 = vld [vmem:[%s3 + $0x8] sm:$0xff]
      %v766 = vld [vmem:[%s3 + $0x10] sm:$0xff]
      %v767 = vld [vmem:[%s3 + $0x18] sm:$0xff]
      %v768 = vld [vmem:[%s3 + $0x20] sm:$0xff]
      %v769 = vld [vmem:[%s3 + $0x28] sm:$0xff]
      %v770 = vld [vmem:[%s3 + $0x30] sm:$0xff]
      %v771 = vld [vmem:[%s3 + $0x38] sm:$0xff]
      %v772 = vld [vmem:[%s3 + $0x40] sm:$0xff]
      %v773 = vld [vmem:[%s3 + $0x48] sm:$0xff]
      %v774 = vld [vmem:[%s3 + $0x50] sm:$0xff]
      %v775 = vld [vmem:[%s3 + $0x58] sm:$0xff]
      %v776 = vld [vmem:[%s3 + $0x60] sm:$0xff]
      %v777 = vld [vmem:[%s3 + $0x68] sm:$0xff]
      %v778 = vld [vmem:[%s3 + $0x70] sm:$0xff]
      %v779 = vld [vmem:[%s3 + $0x78] sm:$0xff]
      %v780 = vld [vmem:[%s3 + $0x80] sm:$0xff]
      %v781 = vld [vmem:[%s3 + $0x88] sm:$0xff]
      %v782 = vld [vmem:[%s3 + $0x90] sm:$0xff]
      %v783 = vld [vmem:[%s3 + $0x98] sm:$0xff]
      %v784 = vld [vmem:[%s3 + $0xa0] sm:$0xff]
      %v785 = vld [vmem:[%s3 + $0xa8] sm:$0xff]
      %v786 = vld [vmem:[%s3 + $0xb0] sm:$0xff]
      %v787 = vld [vmem:[%s3 + $0xb8] sm:$0xff]
      %v788 = vld [vmem:[%s3 + $0xc0] sm:$0xff]
      %v789 = vld [vmem:[%s3 + $0xc8] sm:$0xff]
      %v790 = vld [vmem:[%s3 + $0xd0] sm:$0xff]
      %v791 = vld [vmem:[%s3 + $0xd8] sm:$0xff]
      %v792 = vld [vmem:[%s3 + $0xe0] sm:$0xff]
      %v793 = vld [vmem:[%s3 + $0xe8] sm:$0xff]
      %v794 = vld [vmem:[%s3 + $0xf0] sm:$0xff]
      %v795 = vld [vmem:[%s3 + $0xf8] sm:$0xff]
      %v796 = vld [vmem:[%s3 + $0x100] sm:$0xff]
      %v797 = vld [vmem:[%s3 + $0x108] sm:$0xff]
      %v798 = vld [vmem:[%s3 + $0x110] sm:$0xff]
      %v799 = vld [vmem:[%s3 + $0x118] sm:$0xff]
      %v800 = vld [vmem:[%s3 + $0x120] sm:$0xff]
      %v801 = vld [vmem:[%s3 + $0x128] sm:$0xff]
      %v802 = vld [vmem:[%s3 + $0x130] sm:$0xff]
      %v803 = vld [vmem:[%s3 + $0x138] sm:$0xff]
      %v804 = vld [vmem:[%s3 + $0x140] sm:$0xff]
      %v805 = vld [vmem:[%s3 + $0x148] sm:$0xff]
      %v806 = vld [vmem:[%s3 + $0x150] sm:$0xff]
      %v807 = vld [vmem:[%s3 + $0x158] sm:$0xff]
      %v808 = vld [vmem:[%s3 + $0x160] sm:$0xff]
      %v809 = vld [vmem:[%s3 + $0x168] sm:$0xff]
      %v810 = vld [vmem:[%s3 + $0x170] sm:$0xff]
      %v811 = vld [vmem:[%s3 + $0x178] sm:$0xff]
      %v812 = vld [vmem:[%s3 + $0x180] sm:$0xff]
      %v813 = vld [vmem:[%s3 + $0x188] sm:$0xff]
      %v814 = vld [vmem:[%s3 + $0x190] sm:$0xff]
      %v815 = vld [vmem:[%s3 + $0x198] sm:$0xff]
      %v816 = vld [vmem:[%s3 + $0x1a0] sm:$0xff]
      %v817 = vld [vmem:[%s3 + $0x1a8] sm:$0xff]
      %v818 = vld [vmem:[%s3 + $0x1b0] sm:$0xff]
      %v819 = vld [vmem:[%s3 + $0x1b8] sm:$0xff]
      %v820 = vld [vmem:[%s3 + $0x1c0] sm:$0xff]
      %v821 = vld [vmem:[%s3 + $0x1c8] sm:$0xff]
      %v822 = vld [vmem:[%s3 + $0x1d0] sm:$0xff]
      %v823 = vld [vmem:[%s3 + $0x1d8] sm:$0xff]
      %v824 = vld [vmem:[%s3 + $0x1e0] sm:$0xff]
      %v825 = vld [vmem:[%s3 + $0x1e8] sm:$0xff]
      %v826 = vld [vmem:[%s3 + $0x1f0] sm:$0xff]
      %v827 = vld [vmem:[%s3 + $0x1f8] sm:$0xff]
      %v828 = vld [vmem:[%s3 + $0x200] sm:$0xff]
      %v829 = vld [vmem:[%s3 + $0x208] sm:$0xff]
      %v830 = vld [vmem:[%s3 + $0x210] sm:$0xff]
      %v831 = vld [vmem:[%s3 + $0x218] sm:$0xff]
      %v832 = vld [vmem:[%s3 + $0x220] sm:$0xff]
      %v833 = vld [vmem:[%s3 + $0x228] sm:$0xff]
      %v834 = vld [vmem:[%s3 + $0x230] sm:$0xff]
      %v835 = vld [vmem:[%s3 + $0x238] sm:$0xff]
      %v836 = vld [vmem:[%s3 + $0x240] sm:$0xff]
      %v837 = vld [vmem:[%s3 + $0x248] sm:$0xff]
      %v838 = vld [vmem:[%s3 + $0x250] sm:$0xff]
      %v839 = vld [vmem:[%s3 + $0x258] sm:$0xff]
      %v840 = vld [vmem:[%s3 + $0x260] sm:$0xff]
      %v841 = vld [vmem:[%s3 + $0x268] sm:$0xff]
      %v842 = vld [vmem:[%s3 + $0x270] sm:$0xff]
      %v843 = vld [vmem:[%s3 + $0x278] sm:$0xff]
      %v844 = vld [vmem:[%s3 + $0x280] sm:$0xff]
      %v845 = vld [vmem:[%s3 + $0x288] sm:$0xff]
      %v846 = vld [vmem:[%s3 + $0x290] sm:$0xff]
      %v847 = vld [vmem:[%s3 + $0x298] sm:$0xff]
      %v848 = vld [vmem:[%s3 + $0x2a0] sm:$0xff]
      %v849 = vld [vmem:[%s3 + $0x2a8] sm:$0xff]
      %v850 = vld [vmem:[%s3 + $0x2b0] sm:$0xff]
      %v851 = vld [vmem:[%s3 + $0x2b8] sm:$0xff]
      %v852 = vld [vmem:[%s3 + $0x2c0] sm:$0xff]
      %v853 = vld [vmem:[%s3 + $0x2c8] sm:$0xff]
      %v854 = vld [vmem:[%s3 + $0x2d0] sm:$0xff]
      %v855 = vld [vmem:[%s3 + $0x2d8] sm:$0xff]
      %v856 = vld [vmem:[%s3 + $0x2e0] sm:$0xff]
      %v857 = vld [vmem:[%s3 + $0x2e8] sm:$0xff]
      %v858 = vld [vmem:[%s3 + $0x2f0] sm:$0xff]
      %v859 = vld [vmem:[%s3 + $0x2f8] sm:$0xff]
      %v860 = vld [vmem:[%s3 + $0x300] sm:$0xff]
      %v861 = vld [vmem:[%s3 + $0x308] sm:$0xff]
      %v862 = vld [vmem:[%s3 + $0x310] sm:$0xff]
      %v863 = vld [vmem:[%s3 + $0x318] sm:$0xff]
      %v864 = vld [vmem:[%s3 + $0x320] sm:$0xff]
      %v865 = vld [vmem:[%s3 + $0x328] sm:$0xff]
      %v866 = vld [vmem:[%s3 + $0x330] sm:$0xff]
      %v867 = vld [vmem:[%s3 + $0x338] sm:$0xff]
      %v868 = vld [vmem:[%s3 + $0x340] sm:$0xff]
      %v869 = vld [vmem:[%s3 + $0x348] sm:$0xff]
      %v870 = vld [vmem:[%s3 + $0x350] sm:$0xff]
      %v871 = vld [vmem:[%s3 + $0x358] sm:$0xff]
      %v872 = vld [vmem:[%s3 + $0x360] sm:$0xff]
      %v873 = vld [vmem:[%s3 + $0x368] sm:$0xff]
      %v874 = vld [vmem:[%s3 + $0x370] sm:$0xff]
      %v875 = vld [vmem:[%s3 + $0x378] sm:$0xff]
      %v876 = vld [vmem:[%s3 + $0x380] sm:$0xff]
      %v877 = vld [vmem:[%s3 + $0x388] sm:$0xff]
      %v878 = vld [vmem:[%s3 + $0x390] sm:$0xff]
      %v879 = vld [vmem:[%s3 + $0x398] sm:$0xff]
      %v880 = vld [vmem:[%s3 + $0x3a0] sm:$0xff]
      %v881 = vld [vmem:[%s3 + $0x3a8] sm:$0xff]
      %v882 = vld [vmem:[%s3 + $0x3b0] sm:$0xff]
      %v883 = vld [vmem:[%s3 + $0x3b8] sm:$0xff]
      %v884 = vld [vmem:[%s3 + $0x3c0] sm:$0xff]
      %v885 = vld [vmem:[%s3 + $0x3c8] sm:$0xff]
      %v886 = vld [vmem:[%s3 + $0x3d0] sm:$0xff]
      %v887 = vld [vmem:[%s3 + $0x3d8] sm:$0xff]
      %v888 = vld [vmem:[%s3 + $0x3e0] sm:$0xff]
      %v889 = vld [vmem:[%s3 + $0x3e8] sm:$0xff]
      %v890 = vld [vmem:[%s3 + $0x3f0] sm:$0xff]
      %v891 = vld [vmem:[%s3 + $0x3f8] sm:$0xff]
      %v892 = vld [vmem:[%s3 + $0x400] sm:$0xff]
      %v893 = vld [vmem:[%s3 + $0x408] sm:$0xff]
      %v894 = vld [vmem:[%s3 + $0x410] sm:$0xff]
      %v895 = vld [vmem:[%s3 + $0x418] sm:$0xff]
      %v896 = vld [vmem:[%s3 + $0x420] sm:$0xff]
      %v897 = vld [vmem:[%s3 + $0x428] sm:$0xff]
      %v898 = vld [vmem:[%s3 + $0x430] sm:$0xff]
      %v899 = vld [vmem:[%s3 + $0x438] sm:$0xff]
      %v900 = vld [vmem:[%s3 + $0x440] sm:$0xff]
      %v901 = vld [vmem:[%s3 + $0x448] sm:$0xff]
      %v902 = vld [vmem:[%s3 + $0x450] sm:$0xff]
      %v903 = vld [vmem:[%s3 + $0x458] sm:$0xff]
      %v904 = vld [vmem:[%s3 + $0x460] sm:$0xff]
      %v905 = vld [vmem:[%s3 + $0x468] sm:$0xff]
      %v906 = vld [vmem:[%s3 + $0x470] sm:$0xff]
      %v907 = vld [vmem:[%s3 + $0x478] sm:$0xff]
      %v908 = vld [vmem:[%s3 + $0x480] sm:$0xff]
      %v909 = vld [vmem:[%s3 + $0x488] sm:$0xff]
      %v910 = vld [vmem:[%s3 + $0x490] sm:$0xff]
      %v911 = vld [vmem:[%s3 + $0x498] sm:$0xff]
      %v912 = vld [vmem:[%s3 + $0x4a0] sm:$0xff]
      %v913 = vld [vmem:[%s3 + $0x4a8] sm:$0xff]
      %v914 = vld [vmem:[%s3 + $0x4b0] sm:$0xff]
      %v915 = vld [vmem:[%s3 + $0x4b8] sm:$0xff]
      %v916 = vld [vmem:[%s3 + $0x4c0] sm:$0xff]
      %v917 = vld [vmem:[%s3 + $0x4c8] sm:$0xff]
      %v918 = vld [vmem:[%s3 + $0x4d0] sm:$0xff]
      %v919 = vld [vmem:[%s3 + $0x4d8] sm:$0xff]
      %v920 = vld [vmem:[%s3 + $0x4e0] sm:$0xff]
      %v921 = vld [vmem:[%s3 + $0x4e8] sm:$0xff]
      %v922 = vld [vmem:[%s3 + $0x4f0] sm:$0xff]
      %v923 = vld [vmem:[%s3 + $0x4f8] sm:$0xff]
      %v924 = vld [vmem:[%s3 + $0x500] sm:$0xff]
      %v925 = vld [vmem:[%s3 + $0x508] sm:$0xff]
      %v926 = vld [vmem:[%s3 + $0x510] sm:$0xff]
      %v927 = vld [vmem:[%s3 + $0x518] sm:$0xff]
      %v928 = vld [vmem:[%s3 + $0x520] sm:$0xff]
      %v929 = vld [vmem:[%s3 + $0x528] sm:$0xff]
      %v930 = vld [vmem:[%s3 + $0x530] sm:$0xff]
      %v931 = vld [vmem:[%s3 + $0x538] sm:$0xff]
      %v932 = vld [vmem:[%s3 + $0x540] sm:$0xff]
      %v933 = vld [vmem:[%s3 + $0x548] sm:$0xff]
      %v934 = vld [vmem:[%s3 + $0x550] sm:$0xff]
      %v935 = vld [vmem:[%s3 + $0x558] sm:$0xff]
      %v936 = vld [vmem:[%s3 + $0x560] sm:$0xff]
      %v937 = vld [vmem:[%s3 + $0x568] sm:$0xff]
      %v938 = vld [vmem:[%s3 + $0x570] sm:$0xff]
      %v939 = vld [vmem:[%s3 + $0x578] sm:$0xff]
      %v940 = vld [vmem:[%s3 + $0x580] sm:$0xff]
      %v941 = vld [vmem:[%s3 + $0x588] sm:$0xff]
      %v942 = vld [vmem:[%s3 + $0x590] sm:$0xff]
      %v943 = vld [vmem:[%s3 + $0x598] sm:$0xff]
      %v944 = vld [vmem:[%s3 + $0x5a0] sm:$0xff]
      %v945 = vld [vmem:[%s3 + $0x5a8] sm:$0xff]
      %v946 = vld [vmem:[%s3 + $0x5b0] sm:$0xff]
      %v947 = vld [vmem:[%s3 + $0x5b8] sm:$0xff]
      %v948 = vld [vmem:[%s3 + $0x5c0] sm:$0xff]
      %v949 = vld [vmem:[%s3 + $0x5c8] sm:$0xff]
      %v950 = vld [vmem:[%s3 + $0x5d0] sm:$0xff]
      %v951 = vld [vmem:[%s3 + $0x5d8] sm:$0xff]
      %v952 = vld [vmem:[%s3 + $0x5e0] sm:$0xff]
      %v953 = vld [vmem:[%s3 + $0x5e8] sm:$0xff]
      %v954 = vld [vmem:[%s3 + $0x5f0] sm:$0xff]
      %v955 = vld [vmem:[%s3 + $0x5f8] sm:$0xff]
      %v956 = vld [vmem:[%s3 + $0x600] sm:$0xff]
      %v957 = vld [vmem:[%s3 + $0x608] sm:$0xff]
      %v958 = vld [vmem:[%s3 + $0x610] sm:$0xff]
      %v959 = vld [vmem:[%s3 + $0x618] sm:$0xff]
      %v960 = vld [vmem:[%s3 + $0x620] sm:$0xff]
      %v961 = vld [vmem:[%s3 + $0x628] sm:$0xff]
      %v962 = vld [vmem:[%s3 + $0x630] sm:$0xff]
      %v963 = vld [vmem:[%s3 + $0x638] sm:$0xff]
      %v964 = vld [vmem:[%s3 + $0x640] sm:$0xff]
      %v965 = vld [vmem:[%s3 + $0x648] sm:$0xff]
      %v966 = vld [vmem:[%s3 + $0x650] sm:$0xff]
      %v967 = vld [vmem:[%s3 + $0x658] sm:$0xff]
      %v968 = vld [vmem:[%s3 + $0x660] sm:$0xff]
      %v969 = vld [vmem:[%s3 + $0x668] sm:$0xff]
      %v970 = vld [vmem:[%s3 + $0x670] sm:$0xff]
      %v971 = vld [vmem:[%s3 + $0x678] sm:$0xff]
      %v972 = vld [vmem:[%s3 + $0x680] sm:$0xff]
      %v973 = vld [vmem:[%s3 + $0x688] sm:$0xff]
      %v974 = vld [vmem:[%s3 + $0x690] sm:$0xff]
      %v975 = vld [vmem:[%s3 + $0x698] sm:$0xff]
      %v976 = vld [vmem:[%s3 + $0x6a0] sm:$0xff]
      %v977 = vld [vmem:[%s3 + $0x6a8] sm:$0xff]
      %v978 = vld [vmem:[%s3 + $0x6b0] sm:$0xff]
      %v979 = vld [vmem:[%s3 + $0x6b8] sm:$0xff]
      %v980 = vld [vmem:[%s3 + $0x6c0] sm:$0xff]
      %v981 = vld [vmem:[%s3 + $0x6c8] sm:$0xff]
      %v982 = vld [vmem:[%s3 + $0x6d0] sm:$0xff]
      %v983 = vld [vmem:[%s3 + $0x6d8] sm:$0xff]
      %v984 = vld [vmem:[%s3 + $0x6e0] sm:$0xff]
      %v985 = vld [vmem:[%s3 + $0x6e8] sm:$0xff]
      %v986 = vld [vmem:[%s3 + $0x6f0] sm:$0xff]
      %v987 = vld [vmem:[%s3 + $0x6f8] sm:$0xff]
      %v988 = vld [vmem:[%s3 + $0x700] sm:$0xff]
      %v989 = vld [vmem:[%s3 + $0x708] sm:$0xff]
      %v990 = vld [vmem:[%s3 + $0x710] sm:$0xff]
      %v991 = vld [vmem:[%s3 + $0x718] sm:$0xff]
      %v992 = vld [vmem:[%s3 + $0x720] sm:$0xff]
      %v993 = vld [vmem:[%s3 + $0x728] sm:$0xff]
      %v994 = vld [vmem:[%s3 + $0x730] sm:$0xff]
      %v995 = vld [vmem:[%s3 + $0x738] sm:$0xff]
      %v996 = vld [vmem:[%s3 + $0x740] sm:$0xff]
      %v997 = vld [vmem:[%s3 + $0x748] sm:$0xff]
      %v998 = vld [vmem:[%s3 + $0x750] sm:$0xff]
      %v999 = vld [vmem:[%s3 + $0x758] sm:$0xff]
      %v1000 = vld [vmem:[%s3 + $0x760] sm:$0xff]
      %v1001 = vld [vmem:[%s3 + $0x768] sm:$0xff]
      %v1002 = vld [vmem:[%s3 + $0x770] sm:$0xff]
      %v1003 = vld [vmem:[%s3 + $0x778] sm:$0xff]
      %v1004 = vld [vmem:[%s3 + $0x780] sm:$0xff]
      %v1005 = vld [vmem:[%s3 + $0x788] sm:$0xff]
      %v1006 = vld [vmem:[%s3 + $0x790] sm:$0xff]
      %v1007 = vld [vmem:[%s3 + $0x798] sm:$0xff]
      %v1008 = vld [vmem:[%s3 + $0x7a0] sm:$0xff]
      %v1009 = vld [vmem:[%s3 + $0x7a8] sm:$0xff]
      %v1010 = vld [vmem:[%s3 + $0x7b0] sm:$0xff]
      %v1011 = vld [vmem:[%s3 + $0x7b8] sm:$0xff]
      %v1012 = vld [vmem:[%s3 + $0x7c0] sm:$0xff]
      %v1013 = vld [vmem:[%s3 + $0x7c8] sm:$0xff]
      %v1014 = vld [vmem:[%s3 + $0x7d0] sm:$0xff]
      %v1015 = vld [vmem:[%s3 + $0x7d8] sm:$0xff]
      %v1016 = vld [vmem:[%s3 + $0x7e0] sm:$0xff]
      %v1017 = vld [vmem:[%s3 + $0x7e8] sm:$0xff]
      %v1018 = vld [vmem:[%s3 + $0x7f0] sm:$0xff]
      %v1019 = vld [vmem:[%s3 + $0x7f8] sm:$0xff]
      %v1020 = vld [vmem:[%s4] sm:$0xff]
      %v1021 = vld [vmem:[%s4 + $0x8] sm:$0xff]
      %v1022 = vld [vmem:[%s4 + $0x10] sm:$0xff]
      %v1023 = vld [vmem:[%s4 + $0x18] sm:$0xff]
      %v1024 = vld [vmem:[%s4 + $0x20] sm:$0xff]
      %v1025 = vld [vmem:[%s4 + $0x28] sm:$0xff]
      %v1026 = vld [vmem:[%s4 + $0x30] sm:$0xff]
      %v1027 = vld [vmem:[%s4 + $0x38] sm:$0xff]
      %v1028 = vld [vmem:[%s4 + $0x40] sm:$0xff]
      %v1029 = vld [vmem:[%s4 + $0x48] sm:$0xff]
      %v1030 = vld [vmem:[%s4 + $0x50] sm:$0xff]
      %v1031 = vld [vmem:[%s4 + $0x58] sm:$0xff]
      %v1032 = vld [vmem:[%s4 + $0x60] sm:$0xff]
      %v1033 = vld [vmem:[%s4 + $0x68] sm:$0xff]
      %v1034 = vld [vmem:[%s4 + $0x70] sm:$0xff]
      %v1035 = vld [vmem:[%s4 + $0x78] sm:$0xff]
      %v1036 = vld [vmem:[%s4 + $0x80] sm:$0xff]
      %v1037 = vld [vmem:[%s4 + $0x88] sm:$0xff]
      %v1038 = vld [vmem:[%s4 + $0x90] sm:$0xff]
      %v1039 = vld [vmem:[%s4 + $0x98] sm:$0xff]
      %v1040 = vld [vmem:[%s4 + $0xa0] sm:$0xff]
      %v1041 = vld [vmem:[%s4 + $0xa8] sm:$0xff]
      %v1042 = vld [vmem:[%s4 + $0xb0] sm:$0xff]
      %v1043 = vld [vmem:[%s4 + $0xb8] sm:$0xff]
      %v1044 = vld [vmem:[%s4 + $0xc0] sm:$0xff]
      %v1045 = vld [vmem:[%s4 + $0xc8] sm:$0xff]
      %v1046 = vld [vmem:[%s4 + $0xd0] sm:$0xff]
      %v1047 = vld [vmem:[%s4 + $0xd8] sm:$0xff]
      %v1048 = vld [vmem:[%s4 + $0xe0] sm:$0xff]
      %v1049 = vld [vmem:[%s4 + $0xe8] sm:$0xff]
      %v1050 = vld [vmem:[%s4 + $0xf0] sm:$0xff]
      %v1051 = vld [vmem:[%s4 + $0xf8] sm:$0xff]
      %v1052 = vld [vmem:[%s4 + $0x100] sm:$0xff]
      %v1053 = vld [vmem:[%s4 + $0x108] sm:$0xff]
      %v1054 = vld [vmem:[%s4 + $0x110] sm:$0xff]
      %v1055 = vld [vmem:[%s4 + $0x118] sm:$0xff]
      %v1056 = vld [vmem:[%s4 + $0x120] sm:$0xff]
      %v1057 = vld [vmem:[%s4 + $0x128] sm:$0xff]
      %v1058 = vld [vmem:[%s4 + $0x130] sm:$0xff]
      %v1059 = vld [vmem:[%s4 + $0x138] sm:$0xff]
      %v1060 = vld [vmem:[%s4 + $0x140] sm:$0xff]
      %v1061 = vld [vmem:[%s4 + $0x148] sm:$0xff]
      %v1062 = vld [vmem:[%s4 + $0x150] sm:$0xff]
      %v1063 = vld [vmem:[%s4 + $0x158] sm:$0xff]
      %v1064 = vld [vmem:[%s4 + $0x160] sm:$0xff]
      %v1065 = vld [vmem:[%s4 + $0x168] sm:$0xff]
      %v1066 = vld [vmem:[%s4 + $0x170] sm:$0xff]
      %v1067 = vld [vmem:[%s4 + $0x178] sm:$0xff]
      %v1068 = vld [vmem:[%s4 + $0x180] sm:$0xff]
      %v1069 = vld [vmem:[%s4 + $0x188] sm:$0xff]
      %v1070 = vld [vmem:[%s4 + $0x190] sm:$0xff]
      %v1071 = vld [vmem:[%s4 + $0x198] sm:$0xff]
      %v1072 = vld [vmem:[%s4 + $0x1a0] sm:$0xff]
      %v1073 = vld [vmem:[%s4 + $0x1a8] sm:$0xff]
      %v1074 = vld [vmem:[%s4 + $0x1b0] sm:$0xff]
      %v1075 = vld [vmem:[%s4 + $0x1b8] sm:$0xff]
      %v1076 = vld [vmem:[%s4 + $0x1c0] sm:$0xff]
      %v1077 = vld [vmem:[%s4 + $0x1c8] sm:$0xff]
      %v1078 = vld [vmem:[%s4 + $0x1d0] sm:$0xff]
      %v1079 = vld [vmem:[%s4 + $0x1d8] sm:$0xff]
      %v1080 = vld [vmem:[%s4 + $0x1e0] sm:$0xff]
      %v1081 = vld [vmem:[%s4 + $0x1e8] sm:$0xff]
      %v1082 = vld [vmem:[%s4 + $0x1f0] sm:$0xff]
      %v1083 = vld [vmem:[%s4 + $0x1f8] sm:$0xff]
      %v1084 = vld [vmem:[%s4 + $0x200] sm:$0xff]
      %v1085 = vld [vmem:[%s4 + $0x208] sm:$0xff]
      %v1086 = vld [vmem:[%s4 + $0x210] sm:$0xff]
      %v1087 = vld [vmem:[%s4 + $0x218] sm:$0xff]
      %v1088 = vld [vmem:[%s4 + $0x220] sm:$0xff]
      %v1089 = vld [vmem:[%s4 + $0x228] sm:$0xff]
      %v1090 = vld [vmem:[%s4 + $0x230] sm:$0xff]
      %v1091 = vld [vmem:[%s4 + $0x238] sm:$0xff]
      %v1092 = vld [vmem:[%s4 + $0x240] sm:$0xff]
      %v1093 = vld [vmem:[%s4 + $0x248] sm:$0xff]
      %v1094 = vld [vmem:[%s4 + $0x250] sm:$0xff]
      %v1095 = vld [vmem:[%s4 + $0x258] sm:$0xff]
      %v1096 = vld [vmem:[%s4 + $0x260] sm:$0xff]
      %v1097 = vld [vmem:[%s4 + $0x268] sm:$0xff]
      %v1098 = vld [vmem:[%s4 + $0x270] sm:$0xff]
      %v1099 = vld [vmem:[%s4 + $0x278] sm:$0xff]
      %v1100 = vld [vmem:[%s4 + $0x280] sm:$0xff]
      %v1101 = vld [vmem:[%s4 + $0x288] sm:$0xff]
      %v1102 = vld [vmem:[%s4 + $0x290] sm:$0xff]
      %v1103 = vld [vmem:[%s4 + $0x298] sm:$0xff]
      %v1104 = vld [vmem:[%s4 + $0x2a0] sm:$0xff]
      %v1105 = vld [vmem:[%s4 + $0x2a8] sm:$0xff]
      %v1106 = vld [vmem:[%s4 + $0x2b0] sm:$0xff]
      %v1107 = vld [vmem:[%s4 + $0x2b8] sm:$0xff]
      %v1108 = vld [vmem:[%s4 + $0x2c0] sm:$0xff]
      %v1109 = vld [vmem:[%s4 + $0x2c8] sm:$0xff]
      %v1110 = vld [vmem:[%s4 + $0x2d0] sm:$0xff]
      %v1111 = vld [vmem:[%s4 + $0x2d8] sm:$0xff]
      %v1112 = vld [vmem:[%s4 + $0x2e0] sm:$0xff]
      %v1113 = vld [vmem:[%s4 + $0x2e8] sm:$0xff]
      %v1114 = vld [vmem:[%s4 + $0x2f0] sm:$0xff]
      %v1115 = vld [vmem:[%s4 + $0x2f8] sm:$0xff]
      %v1116 = vld [vmem:[%s4 + $0x300] sm:$0xff]
      %v1117 = vld [vmem:[%s4 + $0x308] sm:$0xff]
      %v1118 = vld [vmem:[%s4 + $0x310] sm:$0xff]
      %v1119 = vld [vmem:[%s4 + $0x318] sm:$0xff]
      %v1120 = vld [vmem:[%s4 + $0x320] sm:$0xff]
      %v1121 = vld [vmem:[%s4 + $0x328] sm:$0xff]
      %v1122 = vld [vmem:[%s4 + $0x330] sm:$0xff]
      %v1123 = vld [vmem:[%s4 + $0x338] sm:$0xff]
      %v1124 = vld [vmem:[%s4 + $0x340] sm:$0xff]
      %v1125 = vld [vmem:[%s4 + $0x348] sm:$0xff]
      %v1126 = vld [vmem:[%s4 + $0x350] sm:$0xff]
      %v1127 = vld [vmem:[%s4 + $0x358] sm:$0xff]
      %v1128 = vld [vmem:[%s4 + $0x360] sm:$0xff]
      %v1129 = vld [vmem:[%s4 + $0x368] sm:$0xff]
      %v1130 = vld [vmem:[%s4 + $0x370] sm:$0xff]
      %v1131 = vld [vmem:[%s4 + $0x378] sm:$0xff]
      %v1132 = vld [vmem:[%s4 + $0x380] sm:$0xff]
      %v1133 = vld [vmem:[%s4 + $0x388] sm:$0xff]
      %v1134 = vld [vmem:[%s4 + $0x390] sm:$0xff]
      %v1135 = vld [vmem:[%s4 + $0x398] sm:$0xff]
      %v1136 = vld [vmem:[%s4 + $0x3a0] sm:$0xff]
      %v1137 = vld [vmem:[%s4 + $0x3a8] sm:$0xff]
      %v1138 = vld [vmem:[%s4 + $0x3b0] sm:$0xff]
      %v1139 = vld [vmem:[%s4 + $0x3b8] sm:$0xff]
      %v1140 = vld [vmem:[%s4 + $0x3c0] sm:$0xff]
      %v1141 = vld [vmem:[%s4 + $0x3c8] sm:$0xff]
      %v1142 = vld [vmem:[%s4 + $0x3d0] sm:$0xff]
      %v1143 = vld [vmem:[%s4 + $0x3d8] sm:$0xff]
      %v1144 = vld [vmem:[%s4 + $0x3e0] sm:$0xff]
      %v1145 = vld [vmem:[%s4 + $0x3e8] sm:$0xff]
      %v1146 = vld [vmem:[%s4 + $0x3f0] sm:$0xff]
      %v1147 = vld [vmem:[%s4 + $0x3f8] sm:$0xff]
      %v1148 = vld [vmem:[%s4 + $0x400] sm:$0xff]
      %v1149 = vld [vmem:[%s4 + $0x408] sm:$0xff]
      %v1150 = vld [vmem:[%s4 + $0x410] sm:$0xff]
      %v1151 = vld [vmem:[%s4 + $0x418] sm:$0xff]
      %v1152 = vld [vmem:[%s4 + $0x420] sm:$0xff]
      %v1153 = vld [vmem:[%s4 + $0x428] sm:$0xff]
      %v1154 = vld [vmem:[%s4 + $0x430] sm:$0xff]
      %v1155 = vld [vmem:[%s4 + $0x438] sm:$0xff]
      %v1156 = vld [vmem:[%s4 + $0x440] sm:$0xff]
      %v1157 = vld [vmem:[%s4 + $0x448] sm:$0xff]
      %v1158 = vld [vmem:[%s4 + $0x450] sm:$0xff]
      %v1159 = vld [vmem:[%s4 + $0x458] sm:$0xff]
      %v1160 = vld [vmem:[%s4 + $0x460] sm:$0xff]
      %v1161 = vld [vmem:[%s4 + $0x468] sm:$0xff]
      %v1162 = vld [vmem:[%s4 + $0x470] sm:$0xff]
      %v1163 = vld [vmem:[%s4 + $0x478] sm:$0xff]
      %v1164 = vld [vmem:[%s4 + $0x480] sm:$0xff]
      %v1165 = vld [vmem:[%s4 + $0x488] sm:$0xff]
      %v1166 = vld [vmem:[%s4 + $0x490] sm:$0xff]
      %v1167 = vld [vmem:[%s4 + $0x498] sm:$0xff]
      %v1168 = vld [vmem:[%s4 + $0x4a0] sm:$0xff]
      %v1169 = vld [vmem:[%s4 + $0x4a8] sm:$0xff]
      %v1170 = vld [vmem:[%s4 + $0x4b0] sm:$0xff]
      %v1171 = vld [vmem:[%s4 + $0x4b8] sm:$0xff]
      %v1172 = vld [vmem:[%s4 + $0x4c0] sm:$0xff]
      %v1173 = vld [vmem:[%s4 + $0x4c8] sm:$0xff]
      %v1174 = vld [vmem:[%s4 + $0x4d0] sm:$0xff]
      %v1175 = vld [vmem:[%s4 + $0x4d8] sm:$0xff]
      %v1176 = vld [vmem:[%s4 + $0x4e0] sm:$0xff]
      %v1177 = vld [vmem:[%s4 + $0x4e8] sm:$0xff]
      %v1178 = vld [vmem:[%s4 + $0x4f0] sm:$0xff]
      %v1179 = vld [vmem:[%s4 + $0x4f8] sm:$0xff]
      %v1180 = vld [vmem:[%s4 + $0x500] sm:$0xff]
      %v1181 = vld [vmem:[%s4 + $0x508] sm:$0xff]
      %v1182 = vld [vmem:[%s4 + $0x510] sm:$0xff]
      %v1183 = vld [vmem:[%s4 + $0x518] sm:$0xff]
      %v1184 = vld [vmem:[%s4 + $0x520] sm:$0xff]
      %v1185 = vld [vmem:[%s4 + $0x528] sm:$0xff]
      %v1186 = vld [vmem:[%s4 + $0x530] sm:$0xff]
      %v1187 = vld [vmem:[%s4 + $0x538] sm:$0xff]
      %v1188 = vld [vmem:[%s4 + $0x540] sm:$0xff]
      %v1189 = vld [vmem:[%s4 + $0x548] sm:$0xff]
      %v1190 = vld [vmem:[%s4 + $0x550] sm:$0xff]
      %v1191 = vld [vmem:[%s4 + $0x558] sm:$0xff]
      %v1192 = vld [vmem:[%s4 + $0x560] sm:$0xff]
      %v1193 = vld [vmem:[%s4 + $0x568] sm:$0xff]
      %v1194 = vld [vmem:[%s4 + $0x570] sm:$0xff]
      %v1195 = vld [vmem:[%s4 + $0x578] sm:$0xff]
      %v1196 = vld [vmem:[%s4 + $0x580] sm:$0xff]
      %v1197 = vld [vmem:[%s4 + $0x588] sm:$0xff]
      %v1198 = vld [vmem:[%s4 + $0x590] sm:$0xff]
      %v1199 = vld [vmem:[%s4 + $0x598] sm:$0xff]
      %v1200 = vld [vmem:[%s4 + $0x5a0] sm:$0xff]
      %v1201 = vld [vmem:[%s4 + $0x5a8] sm:$0xff]
      %v1202 = vld [vmem:[%s4 + $0x5b0] sm:$0xff]
      %v1203 = vld [vmem:[%s4 + $0x5b8] sm:$0xff]
      %v1204 = vld [vmem:[%s4 + $0x5c0] sm:$0xff]
      %v1205 = vld [vmem:[%s4 + $0x5c8] sm:$0xff]
      %v1206 = vld [vmem:[%s4 + $0x5d0] sm:$0xff]
      %v1207 = vld [vmem:[%s4 + $0x5d8] sm:$0xff]
      %v1208 = vld [vmem:[%s4 + $0x5e0] sm:$0xff]
      %v1209 = vld [vmem:[%s4 + $0x5e8] sm:$0xff]
      %v1210 = vld [vmem:[%s4 + $0x5f0] sm:$0xff]
      %v1211 = vld [vmem:[%s4 + $0x5f8] sm:$0xff]
      %v1212 = vld [vmem:[%s4 + $0x600] sm:$0xff]
      %v1213 = vld [vmem:[%s4 + $0x608] sm:$0xff]
      %v1214 = vld [vmem:[%s4 + $0x610] sm:$0xff]
      %v1215 = vld [vmem:[%s4 + $0x618] sm:$0xff]
      %v1216 = vld [vmem:[%s4 + $0x620] sm:$0xff]
      %v1217 = vld [vmem:[%s4 + $0x628] sm:$0xff]
      %v1218 = vld [vmem:[%s4 + $0x630] sm:$0xff]
      %v1219 = vld [vmem:[%s4 + $0x638] sm:$0xff]
      %v1220 = vld [vmem:[%s4 + $0x640] sm:$0xff]
      %v1221 = vld [vmem:[%s4 + $0x648] sm:$0xff]
      %v1222 = vld [vmem:[%s4 + $0x650] sm:$0xff]
      %v1223 = vld [vmem:[%s4 + $0x658] sm:$0xff]
      %v1224 = vld [vmem:[%s4 + $0x660] sm:$0xff]
      %v1225 = vld [vmem:[%s4 + $0x668] sm:$0xff]
      %v1226 = vld [vmem:[%s4 + $0x670] sm:$0xff]
      %v1227 = vld [vmem:[%s4 + $0x678] sm:$0xff]
      %v1228 = vld [vmem:[%s4 + $0x680] sm:$0xff]
      %v1229 = vld [vmem:[%s4 + $0x688] sm:$0xff]
      %v1230 = vld [vmem:[%s4 + $0x690] sm:$0xff]
      %v1231 = vld [vmem:[%s4 + $0x698] sm:$0xff]
      %v1232 = vld [vmem:[%s4 + $0x6a0] sm:$0xff]
      %v1233 = vld [vmem:[%s4 + $0x6a8] sm:$0xff]
      %v1234 = vld [vmem:[%s4 + $0x6b0] sm:$0xff]
      %v1235 = vld [vmem:[%s4 + $0x6b8] sm:$0xff]
      %v1236 = vld [vmem:[%s4 + $0x6c0] sm:$0xff]
      %v1237 = vld [vmem:[%s4 + $0x6c8] sm:$0xff]
      %v1238 = vld [vmem:[%s4 + $0x6d0] sm:$0xff]
      %v1239 = vld [vmem:[%s4 + $0x6d8] sm:$0xff]
      %v1240 = vld [vmem:[%s4 + $0x6e0] sm:$0xff]
      %v1241 = vld [vmem:[%s4 + $0x6e8] sm:$0xff]
      %v1242 = vld [vmem:[%s4 + $0x6f0] sm:$0xff]
      %v1243 = vld [vmem:[%s4 + $0x6f8] sm:$0xff]
      %v1244 = vld [vmem:[%s4 + $0x700] sm:$0xff]
      %v1245 = vld [vmem:[%s4 + $0x708] sm:$0xff]
      %v1246 = vld [vmem:[%s4 + $0x710] sm:$0xff]
      %v1247 = vld [vmem:[%s4 + $0x718] sm:$0xff]
      %v1248 = vld [vmem:[%s4 + $0x720] sm:$0xff]
      %v1249 = vld [vmem:[%s4 + $0x728] sm:$0xff]
      %v1250 = vld [vmem:[%s4 + $0x730] sm:$0xff]
      %v1251 = vld [vmem:[%s4 + $0x738] sm:$0xff]
      %v1252 = vld [vmem:[%s4 + $0x740] sm:$0xff]
      %v1253 = vld [vmem:[%s4 + $0x748] sm:$0xff]
      %v1254 = vld [vmem:[%s4 + $0x750] sm:$0xff]
      %v1255 = vld [vmem:[%s4 + $0x758] sm:$0xff]
      %v1256 = vld [vmem:[%s4 + $0x760] sm:$0xff]
      %v1257 = vld [vmem:[%s4 + $0x768] sm:$0xff]
      %v1258 = vld [vmem:[%s4 + $0x770] sm:$0xff]
      %v1259 = vld [vmem:[%s4 + $0x778] sm:$0xff]
      %v1260 = vld [vmem:[%s4 + $0x780] sm:$0xff]
      %v1261 = vld [vmem:[%s4 + $0x788] sm:$0xff]
      %v1262 = vld [vmem:[%s4 + $0x790] sm:$0xff]
      %v1263 = vld [vmem:[%s4 + $0x798] sm:$0xff]
      %v1264 = vld [vmem:[%s4 + $0x7a0] sm:$0xff]
      %v1265 = vld [vmem:[%s4 + $0x7a8] sm:$0xff]
      %v1266 = vld [vmem:[%s4 + $0x7b0] sm:$0xff]
      %v1267 = vld [vmem:[%s4 + $0x7b8] sm:$0xff]
      %v1268 = vld [vmem:[%s4 + $0x7c0] sm:$0xff]
      %v1269 = vld [vmem:[%s4 + $0x7c8] sm:$0xff]
      %v1270 = vld [vmem:[%s4 + $0x7d0] sm:$0xff]
      %v1271 = vld [vmem:[%s4 + $0x7d8] sm:$0xff]
      %v1272 = vld [vmem:[%s4 + $0x7e0] sm:$0xff]
      %v1273 = vld [vmem:[%s4 + $0x7e8] sm:$0xff]
      %v1274 = vld [vmem:[%s4 + $0x7f0] sm:$0xff]
      %v1275 = vld [vmem:[%s4 + $0x7f8] sm:$0xff]
      %1276 = vmatprep.subr.mxu0 %v1021
      %1277 = vmatpush1.msra.mxu0 %v1020
      %1278 = vmatprep.subr.mxu0 %v1025
      %1279 = vmatpush1.msra.mxu0 %v1024
      %1280 = vmatprep.subr.mxu0 %v1029
      %1281 = vmatpush1.msra.mxu0 %v1028
      %1282 = vmatprep.subr.mxu0 %v1033
      %1283 = vmatpush1.msra.mxu0 %v1032
      %1284 = vmatprep.subr.mxu0 %v1037
      %1285 = vmatpush1.msra.mxu0 %v1036
      %1286 = vmatprep.subr.mxu0 %v1041
      %1287 = vmatpush1.msra.mxu0 %v1040
      %1288 = vmatprep.subr.mxu0 %v1045
      %1289 = vmatpush1.msra.mxu0 %v1044
      %1290 = vmatprep.subr.mxu0 %v1049
      %1291 = vmatpush1.msra.mxu0 %v1048
      %1292 = vmatprep.subr.mxu0 %v1053
      %1293 = vmatpush1.msra.mxu0 %v1052
      %1294 = vmatprep.subr.mxu0 %v1057
      %1295 = vmatpush1.msra.mxu0 %v1056
      %1296 = vmatprep.subr.mxu0 %v1061
      %1297 = vmatpush1.msra.mxu0 %v1060
      %1298 = vmatprep.subr.mxu0 %v1065
      %1299 = vmatpush1.msra.mxu0 %v1064
      %1300 = vmatprep.subr.mxu0 %v1069
      %1301 = vmatpush1.msra.mxu0 %v1068
      %1302 = vmatprep.subr.mxu0 %v1073
      %1303 = vmatpush1.msra.mxu0 %v1072
      %1304 = vmatprep.subr.mxu0 %v1077
      %1305 = vmatpush1.msra.mxu0 %v1076
      %1306 = vmatprep.subr.mxu0 %v1081
      %1307 = vmatpush1.msra.mxu0 %v1080
      %1308 = vmatprep.subr.mxu0 %v1085
      %1309 = vmatpush1.msra.mxu0 %v1084
      %1310 = vmatprep.subr.mxu0 %v1089
      %1311 = vmatpush1.msra.mxu0 %v1088
      %1312 = vmatprep.subr.mxu0 %v1093
      %1313 = vmatpush1.msra.mxu0 %v1092
      %1314 = vmatprep.subr.mxu0 %v1097
      %1315 = vmatpush1.msra.mxu0 %v1096
      %1316 = vmatprep.subr.mxu0 %v1101
      %1317 = vmatpush1.msra.mxu0 %v1100
      %1318 = vmatprep.subr.mxu0 %v1105
      %1319 = vmatpush1.msra.mxu0 %v1104
      %1320 = vmatprep.subr.mxu0 %v1109
      %1321 = vmatpush1.msra.mxu0 %v1108
      %1322 = vmatprep.subr.mxu0 %v1113
      %1323 = vmatpush1.msra.mxu0 %v1112
      %1324 = vmatprep.subr.mxu0 %v1117
      %1325 = vmatpush1.msra.mxu0 %v1116
      %1326 = vmatprep.subr.mxu0 %v1121
      %1327 = vmatpush1.msra.mxu0 %v1120
      %1328 = vmatprep.subr.mxu0 %v1125
      %1329 = vmatpush1.msra.mxu0 %v1124
      %1330 = vmatprep.subr.mxu0 %v1129
      %1331 = vmatpush1.msra.mxu0 %v1128
      %1332 = vmatprep.subr.mxu0 %v1133
      %1333 = vmatpush1.msra.mxu0 %v1132
      %1334 = vmatprep.subr.mxu0 %v1137
      %1335 = vmatpush1.msra.mxu0 %v1136
      %1336 = vmatprep.subr.mxu0 %v1141
      %1337 = vmatpush1.msra.mxu0 %v1140
      %1338 = vmatprep.subr.mxu0 %v1145
      %1339 = vmatpush1.msra.mxu0 %v1144
      %1340 = vmatprep.mubr.f32.mxu0 %v745
      %1341 = vmatmul.mubr.f32.gmra.mrb[0].mxu0 %v736
      %v1342 = vpop.f32.mrb[0].mxu0
      %v1343 = vadd.f32 0.0, %v1342
      %v1344 = vpop.f32.mrb[0].mxu0
      %v1345 = vadd.f32 0.0, %v1344
      %1346 = vdwg.mxu0
      %1347 = vmatprep.subr.mxu0 %v1149
      %1348 = vmatpush1.msra.mxu0 %v1148
      %1349 = vmatprep.subr.mxu0 %v1153
      %1350 = vmatpush1.msra.mxu0 %v1152
      %1351 = vmatprep.subr.mxu0 %v1157
      %1352 = vmatpush1.msra.mxu0 %v1156
      %1353 = vmatprep.subr.mxu0 %v1161
      %1354 = vmatpush1.msra.mxu0 %v1160
      %1355 = vmatprep.subr.mxu0 %v1165
      %1356 = vmatpush1.msra.mxu0 %v1164
      %1357 = vmatprep.subr.mxu0 %v1169
      %1358 = vmatpush1.msra.mxu0 %v1168
      %1359 = vmatprep.subr.mxu0 %v1173
      %1360 = vmatpush1.msra.mxu0 %v1172
      %1361 = vmatprep.subr.mxu0 %v1177
      %1362 = vmatpush1.msra.mxu0 %v1176
      %1363 = vmatprep.subr.mxu0 %v1181
      %1364 = vmatpush1.msra.mxu0 %v1180
      %1365 = vmatprep.subr.mxu0 %v1185
      %1366 = vmatpush1.msra.mxu0 %v1184
      %1367 = vmatprep.subr.mxu0 %v1189
      %1368 = vmatpush1.msra.mxu0 %v1188
      %1369 = vmatprep.subr.mxu0 %v1193
      %1370 = vmatpush1.msra.mxu0 %v1192
      %1371 = vmatprep.subr.mxu0 %v1197
      %1372 = vmatpush1.msra.mxu0 %v1196
      %1373 = vmatprep.subr.mxu0 %v1201
      %1374 = vmatpush1.msra.mxu0 %v1200
      %1375 = vmatprep.subr.mxu0 %v1205
      %1376 = vmatpush1.msra.mxu0 %v1204
      %1377 = vmatprep.subr.mxu0 %v1209
      %1378 = vmatpush1.msra.mxu0 %v1208
      %1379 = vmatprep.subr.mxu0 %v1213
      %1380 = vmatpush1.msra.mxu0 %v1212
      %1381 = vmatprep.subr.mxu0 %v1217
      %1382 = vmatpush1.msra.mxu0 %v1216
      %1383 = vmatprep.subr.mxu0 %v1221
      %1384 = vmatpush1.msra.mxu0 %v1220
      %1385 = vmatprep.subr.mxu0 %v1225
      %1386 = vmatpush1.msra.mxu0 %v1224
      %1387 = vmatprep.subr.mxu0 %v1229
      %1388 = vmatpush1.msra.mxu0 %v1228
      %1389 = vmatprep.subr.mxu0 %v1233
      %1390 = vmatpush1.msra.mxu0 %v1232
      %1391 = vmatprep.subr.mxu0 %v1237
      %1392 = vmatpush1.msra.mxu0 %v1236
      %1393 = vmatprep.subr.mxu0 %v1241
      %1394 = vmatpush1.msra.mxu0 %v1240
      %1395 = vmatprep.subr.mxu0 %v1245
      %1396 = vmatpush1.msra.mxu0 %v1244
      %1397 = vmatprep.subr.mxu0 %v1249
      %1398 = vmatpush1.msra.mxu0 %v1248
      %1399 = vmatprep.subr.mxu0 %v1253
      %1400 = vmatpush1.msra.mxu0 %v1252
      %1401 = vmatprep.subr.mxu0 %v1257
      %1402 = vmatpush1.msra.mxu0 %v1256
      %1403 = vmatprep.subr.mxu0 %v1261
      %1404 = vmatpush1.msra.mxu0 %v1260
      %1405 = vmatprep.subr.mxu0 %v1265
      %1406 = vmatpush1.msra.mxu0 %v1264
      %1407 = vmatprep.subr.mxu0 %v1269
      %1408 = vmatpush1.msra.mxu0 %v1268
      %1409 = vmatprep.subr.mxu0 %v1273
      %1410 = vmatpush1.msra.mxu0 %v1272
      %1411 = vmatprep.mubr.f32.mxu0 %v763
      %1412 = vmatmul.mubr.f32.gmra.mrb[0].mxu0 %v754
      %v1413 = vpop.f32.mrb[0].mxu0
      %v1414 = vadd.f32 %v1343, %v1413
      %v1415 = vpop.f32.mrb[0].mxu0
      %v1416 = vadd.f32 %v1345, %v1415
      %1417 = vdwg.mxu0
      %1418 = vmatprep.subr.mxu0 %v1023
      %1419 = vmatpush1.msra.mxu0 %v1022
      %1420 = vmatprep.subr.mxu0 %v1027
      %1421 = vmatpush1.msra.mxu0 %v1026
      %1422 = vmatprep.subr.mxu0 %v1031
      %1423 = vmatpush1.msra.mxu0 %v1030
      %1424 = vmatprep.subr.mxu0 %v1035
      %1425 = vmatpush1.msra.mxu0 %v1034
      %1426 = vmatprep.subr.mxu0 %v1039
      %1427 = vmatpush1.msra.mxu0 %v1038
      %1428 = vmatprep.subr.mxu0 %v1043
      %1429 = vmatpush1.msra.mxu0 %v1042
      %1430 = vmatprep.subr.mxu0 %v1047
      %1431 = vmatpush1.msra.mxu0 %v1046
      %1432 = vmatprep.subr.mxu0 %v1051
      %1433 = vmatpush1.msra.mxu0 %v1050
      %1434 = vmatprep.subr.mxu0 %v1055
      %1435 = vmatpush1.msra.mxu0 %v1054
      %1436 = vmatprep.subr.mxu0 %v1059
      %1437 = vmatpush1.msra.mxu0 %v1058
      %1438 = vmatprep.subr.mxu0 %v1063
      %1439 = vmatpush1.msra.mxu0 %v1062
      %1440 = vmatprep.subr.mxu0 %v1067
      %1441 = vmatpush1.msra.mxu0 %v1066
      %1442 = vmatprep.subr.mxu0 %v1071
      %1443 = vmatpush1.msra.mxu0 %v1070
      %1444 = vmatprep.subr.mxu0 %v1075
      %1445 = vmatpush1.msra.mxu0 %v1074
      %1446 = vmatprep.subr.mxu0 %v1079
      %1447 = vmatpush1.msra.mxu0 %v1078
      %1448 = vmatprep.subr.mxu0 %v1083
      %1449 = vmatpush1.msra.mxu0 %v1082
      %1450 = vmatprep.subr.mxu0 %v1087
      %1451 = vmatpush1.msra.mxu0 %v1086
      %1452 = vmatprep.subr.mxu0 %v1091
      %1453 = vmatpush1.msra.mxu0 %v1090
      %1454 = vmatprep.subr.mxu0 %v1095
      %1455 = vmatpush1.msra.mxu0 %v1094
      %1456 = vmatprep.subr.mxu0 %v1099
      %1457 = vmatpush1.msra.mxu0 %v1098
      %1458 = vmatprep.subr.mxu0 %v1103
      %1459 = vmatpush1.msra.mxu0 %v1102
      %1460 = vmatprep.subr.mxu0 %v1107
      %1461 = vmatpush1.msra.mxu0 %v1106
      %1462 = vmatprep.subr.mxu0 %v1111
      %1463 = vmatpush1.msra.mxu0 %v1110
      %1464 = vmatprep.subr.mxu0 %v1115
      %1465 = vmatpush1.msra.mxu0 %v1114
      %1466 = vmatprep.subr.mxu0 %v1119
      %1467 = vmatpush1.msra.mxu0 %v1118
      %1468 = vmatprep.subr.mxu0 %v1123
      %1469 = vmatpush1.msra.mxu0 %v1122
      %1470 = vmatprep.subr.mxu0 %v1127
      %1471 = vmatpush1.msra.mxu0 %v1126
      %1472 = vmatprep.subr.mxu0 %v1131
      %1473 = vmatpush1.msra.mxu0 %v1130
      %1474 = vmatprep.subr.mxu0 %v1135
      %1475 = vmatpush1.msra.mxu0 %v1134
      %1476 = vmatprep.subr.mxu0 %v1139
      %1477 = vmatpush1.msra.mxu0 %v1138
      %1478 = vmatprep.subr.mxu0 %v1143
      %1479 = vmatpush1.msra.mxu0 %v1142
      %1480 = vmatprep.subr.mxu0 %v1147
      %1481 = vmatpush1.msra.mxu0 %v1146
      %1482 = vmatprep.mubr.f32.mxu0 %v745
      %1483 = vmatmul.mubr.f32.gmra.mrb[0].mxu0 %v736
      %v1484 = vpop.f32.mrb[0].mxu0
      %v1485 = vadd.f32 0.0, %v1484
      %v1486 = vpop.f32.mrb[0].mxu0
      %v1487 = vadd.f32 0.0, %v1486
      %1488 = vdwg.mxu0
      %1489 = vmatprep.subr.mxu0 %v1151
      %1490 = vmatpush1.msra.mxu0 %v1150
      %1491 = vmatprep.subr.mxu0 %v1155
      %1492 = vmatpush1.msra.mxu0 %v1154
      %1493 = vmatprep.subr.mxu0 %v1159
      %1494 = vmatpush1.msra.mxu0 %v1158
      %1495 = vmatprep.subr.mxu0 %v1163
      %1496 = vmatpush1.msra.mxu0 %v1162
      %1497 = vmatprep.subr.mxu0 %v1167
      %1498 = vmatpush1.msra.mxu0 %v1166
      %1499 = vmatprep.subr.mxu0 %v1171
      %1500 = vmatpush1.msra.mxu0 %v1170
      %1501 = vmatprep.subr.mxu0 %v1175
      %1502 = vmatpush1.msra.mxu0 %v1174
      %1503 = vmatprep.subr.mxu0 %v1179
      %1504 = vmatpush1.msra.mxu0 %v1178
      %1505 = vmatprep.subr.mxu0 %v1183
      %1506 = vmatpush1.msra.mxu0 %v1182
      %1507 = vmatprep.subr.mxu0 %v1187
      %1508 = vmatpush1.msra.mxu0 %v1186
      %1509 = vmatprep.subr.mxu0 %v1191
      %1510 = vmatpush1.msra.mxu0 %v1190
      %1511 = vmatprep.subr.mxu0 %v1195
      %1512 = vmatpush1.msra.mxu0 %v1194
      %1513 = vmatprep.subr.mxu0 %v1199
      %1514 = vmatpush1.msra.mxu0 %v1198
      %1515 = vmatprep.subr.mxu0 %v1203
      %1516 = vmatpush1.msra.mxu0 %v1202
      %1517 = vmatprep.subr.mxu0 %v1207
      %1518 = vmatpush1.msra.mxu0 %v1206
      %1519 = vmatprep.subr.mxu0 %v1211
      %1520 = vmatpush1.msra.mxu0 %v1210
      %1521 = vmatprep.subr.mxu0 %v1215
      %1522 = vmatpush1.msra.mxu0 %v1214
      %1523 = vmatprep.subr.mxu0 %v1219
      %1524 = vmatpush1.msra.mxu0 %v1218
      %1525 = vmatprep.subr.mxu0 %v1223
      %1526 = vmatpush1.msra.mxu0 %v1222
      %1527 = vmatprep.subr.mxu0 %v1227
      %1528 = vmatpush1.msra.mxu0 %v1226
      %1529 = vmatprep.subr.mxu0 %v1231
      %1530 = vmatpush1.msra.mxu0 %v1230
      %1531 = vmatprep.subr.mxu0 %v1235
      %1532 = vmatpush1.msra.mxu0 %v1234
      %1533 = vmatprep.subr.mxu0 %v1239
      %1534 = vmatpush1.msra.mxu0 %v1238
      %1535 = vmatprep.subr.mxu0 %v1243
      %1536 = vmatpush1.msra.mxu0 %v1242
      %1537 = vmatprep.subr.mxu0 %v1247
      %1538 = vmatpush1.msra.mxu0 %v1246
      %1539 = vmatprep.subr.mxu0 %v1251
      %1540 = vmatpush1.msra.mxu0 %v1250
      %1541 = vmatprep.subr.mxu0 %v1255
      %1542 = vmatpush1.msra.mxu0 %v1254
      %1543 = vmatprep.subr.mxu0 %v1259
      %1544 = vmatpush1.msra.mxu0 %v1258
      %1545 = vmatprep.subr.mxu0 %v1263
      %1546 = vmatpush1.msra.mxu0 %v1262
      %1547 = vmatprep.subr.mxu0 %v1267
      %1548 = vmatpush1.msra.mxu0 %v1266
      %1549 = vmatprep.subr.mxu0 %v1271
      %1550 = vmatpush1.msra.mxu0 %v1270
      %1551 = vmatprep.subr.mxu0 %v1275
      %1552 = vmatpush1.msra.mxu0 %v1274
      %1553 = vmatprep.mubr.f32.mxu0 %v763
      %1554 = vmatmul.mubr.f32.gmra.mrb[0].mxu0 %v754
      %v1555 = vpop.f32.mrb[0].mxu0
      %v1556 = vadd.f32 %v1485, %v1555
      %v1557 = vpop.f32.mrb[0].mxu0
      %v1558 = vadd.f32 %v1487, %v1557
      %1559 = vdwg.mxu0
      %1560 = vmatprep.subr.mxu0 %v765
      %1561 = vmatpush1.msra.mxu0 %v764
      %1562 = vmatprep.subr.mxu0 %v769
      %1563 = vmatpush1.msra.mxu0 %v768
      %1564 = vmatprep.subr.mxu0 %v773
      %1565 = vmatpush1.msra.mxu0 %v772
      %1566 = vmatprep.subr.mxu0 %v777
      %1567 = vmatpush1.msra.mxu0 %v776
      %1568 = vmatprep.subr.mxu0 %v781
      %1569 = vmatpush1.msra.mxu0 %v780
      %1570 = vmatprep.subr.mxu0 %v785
      %1571 = vmatpush1.msra.mxu0 %v784
      %1572 = vmatprep.subr.mxu0 %v789
      %1573 = vmatpush1.msra.mxu0 %v788
      %1574 = vmatprep.subr.mxu0 %v793
      %1575 = vmatpush1.msra.mxu0 %v792
      %1576 = vmatprep.subr.mxu0 %v797
      %1577 = vmatpush1.msra.mxu0 %v796
      %1578 = vmatprep.subr.mxu0 %v801
      %1579 = vmatpush1.msra.mxu0 %v800
      %1580 = vmatprep.subr.mxu0 %v805
      %1581 = vmatpush1.msra.mxu0 %v804
      %1582 = vmatprep.subr.mxu0 %v809
      %1583 = vmatpush1.msra.mxu0 %v808
      %1584 = vmatprep.subr.mxu0 %v813
      %1585 = vmatpush1.msra.mxu0 %v812
      %1586 = vmatprep.subr.mxu0 %v817
      %1587 = vmatpush1.msra.mxu0 %v816
      %1588 = vmatprep.subr.mxu0 %v821
      %1589 = vmatpush1.msra.mxu0 %v820
      %1590 = vmatprep.subr.mxu0 %v825
      %1591 = vmatpush1.msra.mxu0 %v824
      %1592 = vmatprep.subr.mxu0 %v829
      %1593 = vmatpush1.msra.mxu0 %v828
      %1594 = vmatprep.subr.mxu0 %v833
      %1595 = vmatpush1.msra.mxu0 %v832
      %1596 = vmatprep.subr.mxu0 %v837
      %1597 = vmatpush1.msra.mxu0 %v836
      %1598 = vmatprep.subr.mxu0 %v841
      %1599 = vmatpush1.msra.mxu0 %v840
      %1600 = vmatprep.subr.mxu0 %v845
      %1601 = vmatpush1.msra.mxu0 %v844
      %1602 = vmatprep.subr.mxu0 %v849
      %1603 = vmatpush1.msra.mxu0 %v848
      %1604 = vmatprep.subr.mxu0 %v853
      %1605 = vmatpush1.msra.mxu0 %v852
      %1606 = vmatprep.subr.mxu0 %v857
      %1607 = vmatpush1.msra.mxu0 %v856
      %1608 = vmatprep.subr.mxu0 %v861
      %1609 = vmatpush1.msra.mxu0 %v860
      %1610 = vmatprep.subr.mxu0 %v865
      %1611 = vmatpush1.msra.mxu0 %v864
      %1612 = vmatprep.subr.mxu0 %v869
      %1613 = vmatpush1.msra.mxu0 %v868
      %1614 = vmatprep.subr.mxu0 %v873
      %1615 = vmatpush1.msra.mxu0 %v872
      %1616 = vmatprep.subr.mxu0 %v877
      %1617 = vmatpush1.msra.mxu0 %v876
      %1618 = vmatprep.subr.mxu0 %v881
      %1619 = vmatpush1.msra.mxu0 %v880
      %1620 = vmatprep.subr.mxu0 %v885
      %1621 = vmatpush1.msra.mxu0 %v884
      %1622 = vmatprep.subr.mxu0 %v889
      %1623 = vmatpush1.msra.mxu0 %v888
      %1624 = vmatprep.mubr.f32.mxu0 %v725
      %1625 = vmatmul.mubr.f32.gmra.mrb[0].mxu0 %v724
      %v1626 = vpop.f32.mrb[0].mxu0
      %v1627 = vadd.f32 %v1414, %v1626
      %v1628 = vpop.f32.mrb[0].mxu0
      %v1629 = vadd.f32 %v1416, %v1628
      %1630 = vdwg.mxu0
      %1631 = vmatprep.subr.mxu0 %v893
      %1632 = vmatpush1.msra.mxu0 %v892
      %1633 = vmatprep.subr.mxu0 %v897
      %1634 = vmatpush1.msra.mxu0 %v896
      %1635 = vmatprep.subr.mxu0 %v901
      %1636 = vmatpush1.msra.mxu0 %v900
      %1637 = vmatprep.subr.mxu0 %v905
      %1638 = vmatpush1.msra.mxu0 %v904
      %1639 = vmatprep.subr.mxu0 %v909
      %1640 = vmatpush1.msra.mxu0 %v908
      %1641 = vmatprep.subr.mxu0 %v913
      %1642 = vmatpush1.msra.mxu0 %v912
      %1643 = vmatprep.subr.mxu0 %v917
      %1644 = vmatpush1.msra.mxu0 %v916
      %1645 = vmatprep.subr.mxu0 %v921
      %1646 = vmatpush1.msra.mxu0 %v920
      %1647 = vmatprep.subr.mxu0 %v925
      %1648 = vmatpush1.msra.mxu0 %v924
      %1649 = vmatprep.subr.mxu0 %v929
      %1650 = vmatpush1.msra.mxu0 %v928
      %1651 = vmatprep.subr.mxu0 %v933
      %1652 = vmatpush1.msra.mxu0 %v932
      %1653 = vmatprep.subr.mxu0 %v937
      %1654 = vmatpush1.msra.mxu0 %v936
      %1655 = vmatprep.subr.mxu0 %v941
      %1656 = vmatpush1.msra.mxu0 %v940
      %1657 = vmatprep.subr.mxu0 %v945
      %1658 = vmatpush1.msra.mxu0 %v944
      %1659 = vmatprep.subr.mxu0 %v949
      %1660 = vmatpush1.msra.mxu0 %v948
      %1661 = vmatprep.subr.mxu0 %v953
      %1662 = vmatpush1.msra.mxu0 %v952
      %1663 = vmatprep.subr.mxu0 %v957
      %1664 = vmatpush1.msra.mxu0 %v956
      %1665 = vmatprep.subr.mxu0 %v961
      %1666 = vmatpush1.msra.mxu0 %v960
      %1667 = vmatprep.subr.mxu0 %v965
      %1668 = vmatpush1.msra.mxu0 %v964
      %1669 = vmatprep.subr.mxu0 %v969
      %1670 = vmatpush1.msra.mxu0 %v968
      %1671 = vmatprep.subr.mxu0 %v973
      %1672 = vmatpush1.msra.mxu0 %v972
      %1673 = vmatprep.subr.mxu0 %v977
      %1674 = vmatpush1.msra.mxu0 %v976
      %1675 = vmatprep.subr.mxu0 %v981
      %1676 = vmatpush1.msra.mxu0 %v980
      %1677 = vmatprep.subr.mxu0 %v985
      %1678 = vmatpush1.msra.mxu0 %v984
      %1679 = vmatprep.subr.mxu0 %v989
      %1680 = vmatpush1.msra.mxu0 %v988
      %1681 = vmatprep.subr.mxu0 %v993
      %1682 = vmatpush1.msra.mxu0 %v992
      %1683 = vmatprep.subr.mxu0 %v997
      %1684 = vmatpush1.msra.mxu0 %v996
      %1685 = vmatprep.subr.mxu0 %v1001
      %1686 = vmatpush1.msra.mxu0 %v1000
      %1687 = vmatprep.subr.mxu0 %v1005
      %1688 = vmatpush1.msra.mxu0 %v1004
      %1689 = vmatprep.subr.mxu0 %v1009
      %1690 = vmatpush1.msra.mxu0 %v1008
      %1691 = vmatprep.subr.mxu0 %v1013
      %1692 = vmatpush1.msra.mxu0 %v1012
      %1693 = vmatprep.subr.mxu0 %v1017
      %1694 = vmatpush1.msra.mxu0 %v1016
      %1695 = vmatprep.mubr.f32.mxu0 %v727
      %1696 = vmatmul.mubr.f32.gmra.mrb[0].mxu0 %v726
      %v1697 = vpop.f32.mrb[0].mxu0
      %v1698 = vadd.f32 %v1627, %v1697
      %v1699 = vpop.f32.mrb[0].mxu0
      %v1700 = vadd.f32 %v1629, %v1699
      %1701 = vdwg.mxu0
      %1702 = vmatprep.subr.mxu0 %v767
      %1703 = vmatpush1.msra.mxu0 %v766
      %1704 = vmatprep.subr.mxu0 %v771
      %1705 = vmatpush1.msra.mxu0 %v770
      %1706 = vmatprep.subr.mxu0 %v775
      %1707 = vmatpush1.msra.mxu0 %v774
      %1708 = vmatprep.subr.mxu0 %v779
      %1709 = vmatpush1.msra.mxu0 %v778
      %1710 = vmatprep.subr.mxu0 %v783
      %1711 = vmatpush1.msra.mxu0 %v782
      %1712 = vmatprep.subr.mxu0 %v787
      %1713 = vmatpush1.msra.mxu0 %v786
      %1714 = vmatprep.subr.mxu0 %v791
      %1715 = vmatpush1.msra.mxu0 %v790
      %1716 = vmatprep.subr.mxu0 %v795
      %1717 = vmatpush1.msra.mxu0 %v794
      %1718 = vmatprep.subr.mxu0 %v799
      %1719 = vmatpush1.msra.mxu0 %v798
      %1720 = vmatprep.subr.mxu0 %v803
      %1721 = vmatpush1.msra.mxu0 %v802
      %1722 = vmatprep.subr.mxu0 %v807
      %1723 = vmatpush1.msra.mxu0 %v806
      %1724 = vmatprep.subr.mxu0 %v811
      %1725 = vmatpush1.msra.mxu0 %v810
      %1726 = vmatprep.subr.mxu0 %v815
      %1727 = vmatpush1.msra.mxu0 %v814
      %1728 = vmatprep.subr.mxu0 %v819
      %1729 = vmatpush1.msra.mxu0 %v818
      %1730 = vmatprep.subr.mxu0 %v823
      %1731 = vmatpush1.msra.mxu0 %v822
      %1732 = vmatprep.subr.mxu0 %v827
      %1733 = vmatpush1.msra.mxu0 %v826
      %1734 = vmatprep.subr.mxu0 %v831
      %1735 = vmatpush1.msra.mxu0 %v830
      %1736 = vmatprep.subr.mxu0 %v835
      %1737 = vmatpush1.msra.mxu0 %v834
      %1738 = vmatprep.subr.mxu0 %v839
      %1739 = vmatpush1.msra.mxu0 %v838
      %1740 = vmatprep.subr.mxu0 %v843
      %1741 = vmatpush1.msra.mxu0 %v842
      %1742 = vmatprep.subr.mxu0 %v847
      %1743 = vmatpush1.msra.mxu0 %v846
      %1744 = vmatprep.subr.mxu0 %v851
      %1745 = vmatpush1.msra.mxu0 %v850
      %1746 = vmatprep.subr.mxu0 %v855
      %1747 = vmatpush1.msra.mxu0 %v854
      %1748 = vmatprep.subr.mxu0 %v859
      %1749 = vmatpush1.msra.mxu0 %v858
      %1750 = vmatprep.subr.mxu0 %v863
      %1751 = vmatpush1.msra.mxu0 %v862
      %1752 = vmatprep.subr.mxu0 %v867
      %1753 = vmatpush1.msra.mxu0 %v866
      %1754 = vmatprep.subr.mxu0 %v871
      %1755 = vmatpush1.msra.mxu0 %v870
      %1756 = vmatprep.subr.mxu0 %v875
      %1757 = vmatpush1.msra.mxu0 %v874
      %1758 = vmatprep.subr.mxu0 %v879
      %1759 = vmatpush1.msra.mxu0 %v878
      %1760 = vmatprep.subr.mxu0 %v883
      %1761 = vmatpush1.msra.mxu0 %v882
      %1762 = vmatprep.subr.mxu0 %v887
      %1763 = vmatpush1.msra.mxu0 %v886
      %1764 = vmatprep.subr.mxu0 %v891
      %1765 = vmatpush1.msra.mxu0 %v890
      %1766 = vmatprep.mubr.f32.mxu0 %v725
      %1767 = vmatmul.mubr.f32.gmra.mrb[0].mxu0 %v724
      %v1768 = vpop.f32.mrb[0].mxu0
      %v1769 = vadd.f32 %v1556, %v1768
      %v1770 = vpop.f32.mrb[0].mxu0
      %v1771 = vadd.f32 %v1558, %v1770
      %1772 = vdwg.mxu0
      %1773 = vmatprep.subr.mxu0 %v895
      %1774 = vmatpush1.msra.mxu0 %v894
      %1775 = vmatprep.subr.mxu0 %v899
      %1776 = vmatpush1.msra.mxu0 %v898
      %1777 = vmatprep.subr.mxu0 %v903
      %1778 = vmatpush1.msra.mxu0 %v902
      %1779 = vmatprep.subr.mxu0 %v907
      %1780 = vmatpush1.msra.mxu0 %v906
      %1781 = vmatprep.subr.mxu0 %v911
      %1782 = vmatpush1.msra.mxu0 %v910
      %1783 = vmatprep.subr.mxu0 %v915
      %1784 = vmatpush1.msra.mxu0 %v914
      %1785 = vmatprep.subr.mxu0 %v919
      %1786 = vmatpush1.msra.mxu0 %v918
      %1787 = vmatprep.subr.mxu0 %v923
      %1788 = vmatpush1.msra.mxu0 %v922
      %1789 = vmatprep.subr.mxu0 %v927
      %1790 = vmatpush1.msra.mxu0 %v926
      %1791 = vmatprep.subr.mxu0 %v931
      %1792 = vmatpush1.msra.mxu0 %v930
      %1793 = vmatprep.subr.mxu0 %v935
      %1794 = vmatpush1.msra.mxu0 %v934
      %1795 = vmatprep.subr.mxu0 %v939
      %1796 = vmatpush1.msra.mxu0 %v938
      %1797 = vmatprep.subr.mxu0 %v943
      %1798 = vmatpush1.msra.mxu0 %v942
      %1799 = vmatprep.subr.mxu0 %v947
      %1800 = vmatpush1.msra.mxu0 %v946
      %1801 = vmatprep.subr.mxu0 %v951
      %1802 = vmatpush1.msra.mxu0 %v950
      %1803 = vmatprep.subr.mxu0 %v955
      %1804 = vmatpush1.msra.mxu0 %v954
      %1805 = vmatprep.subr.mxu0 %v959
      %1806 = vmatpush1.msra.mxu0 %v958
      %1807 = vmatprep.subr.mxu0 %v963
      %1808 = vmatpush1.msra.mxu0 %v962
      %1809 = vmatprep.subr.mxu0 %v967
      %1810 = vmatpush1.msra.mxu0 %v966
      %1811 = vmatprep.subr.mxu0 %v971
      %1812 = vmatpush1.msra.mxu0 %v970
      %1813 = vmatprep.subr.mxu0 %v975
      %1814 = vmatpush1.msra.mxu0 %v974
      %1815 = vmatprep.subr.mxu0 %v979
      %1816 = vmatpush1.msra.mxu0 %v978
      %1817 = vmatprep.subr.mxu0 %v983
      %1818 = vmatpush1.msra.mxu0 %v982
      %1819 = vmatprep.subr.mxu0 %v987
      %1820 = vmatpush1.msra.mxu0 %v986
      %1821 = vmatprep.subr.mxu0 %v991
      %1822 = vmatpush1.msra.mxu0 %v990
      %1823 = vmatprep.subr.mxu0 %v995
      %1824 = vmatpush1.msra.mxu0 %v994
      %1825 = vmatprep.subr.mxu0 %v999
      %1826 = vmatpush1.msra.mxu0 %v998
      %1827 = vmatprep.subr.mxu0 %v1003
      %1828 = vmatpush1.msra.mxu0 %v1002
      %1829 = vmatprep.subr.mxu0 %v1007
      %1830 = vmatpush1.msra.mxu0 %v1006
      %1831 = vmatprep.subr.mxu0 %v1011
      %1832 = vmatpush1.msra.mxu0 %v1010
      %1833 = vmatprep.subr.mxu0 %v1015
      %1834 = vmatpush1.msra.mxu0 %v1014
      %1835 = vmatprep.subr.mxu0 %v1019
      %1836 = vmatpush1.msra.mxu0 %v1018
      %1837 = vmatprep.mubr.f32.mxu0 %v727
      %1838 = vmatmul.mubr.f32.gmra.mrb[0].mxu0 %v726
      %v1839 = vpop.f32.mrb[0].mxu0
      %v1840 = vadd.f32 %v1769, %v1839
      %v1841 = vpop.f32.mrb[0].mxu0
      %v1842 = vadd.f32 %v1771, %v1841
      %1843 = vdwg.mxu0
      %v1844 = vxor.u32 %v1698, 2147483648
      %v1845 = vxor.u32 %v1700, 2147483648
      %v1846 = vxor.u32 %v1840, 2147483648
      %v1847 = vxor.u32 %v1842, 2147483648
      %v1848 = vmul.f32 %v1844, 1.442695
      %v1849 = vpow.pop %v1848
      %v1850 = vmul.f32 %v1845, 1.442695
      %v1851 = vpow.pop %v1850
      %v1852 = vmul.f32 %v1846, 1.442695
      %v1853 = vpow.pop %v1852
      %v1854 = vmul.f32 %v1847, 1.442695
      %v1855 = vpow.pop %v1854
      %v1856 = vadd.f32 %v1849, 1.0
      %v1857 = vadd.f32 %v1851, 1.0
      %v1858 = vadd.f32 %v1853, 1.0
      %v1859 = vadd.f32 %v1855, 1.0
      %v1860 = vrcp.pop %v1856
      %v1861 = vmul.f32 1.0, %v1860
      %v1862 = vrcp.pop %v1857
      %v1863 = vmul.f32 1.0, %v1862
      %v1864 = vrcp.pop %v1858
      %v1865 = vmul.f32 1.0, %v1864
      %v1866 = vrcp.pop %v1859
      %v1867 = vmul.f32 1.0, %v1866
      %v1868 = vlaneseq
      %v1869 = vshrl.u32 %v1868, 7
      %v1870 = vsub.s32 0, %v1869
      %v1871 = vrot.slane %v1861, %v1870
      %v1872 = vlaneseq
      %v1873 = vshrl.u32 %v1872, 7
      %v1874 = vsub.s32 0, %v1873
      %v1875 = vrot.slane %v1863, %v1874
      %v1876 = vlaneseq
      %v1877 = vshrl.u32 %v1876, 7
      %v1878 = vsub.s32 0, %v1877
      %v1879 = vrot.slane %v1865, %v1878
      %v1880 = vlaneseq
      %v1881 = vshrl.u32 %v1880, 7
      %v1882 = vsub.s32 0, %v1881
      %v1883 = vrot.slane %v1867, %v1882
      %v1884 = vmul.f32 %v654, %v1871
      %v1885 = vmul.f32 %v654, %v1875
      %v1886 = vmul.f32 %v654, %v1879
      %v1887 = vmul.f32 %v654, %v1883
      %v1888 = vmul.f32 %v659, %v1871
      %v1889 = vmul.f32 %v659, %v1875
      %v1890 = vmul.f32 %v659, %v1879
      %v1891 = vmul.f32 %v659, %v1883
      %v1892 = vmul.f32 %v664, %v1871
      %v1893 = vmul.f32 %v664, %v1875
      %v1894 = vmul.f32 %v664, %v1879
      %v1895 = vmul.f32 %v664, %v1883
      %v1896 = vmul.f32 %v669, %v1871
      %v1897 = vmul.f32 %v669, %v1875
      %v1898 = vmul.f32 %v669, %v1879
      %v1899 = vmul.f32 %v669, %v1883
      %v1900 = vmul.f32 %v225, %v1884
      %v1901 = vmul.f32 %v226, %v1885
      %v1902 = vmul.f32 %v227, %v1886
      %v1903 = vmul.f32 %v228, %v1887
      %v1904 = vmul.f32 %v229, %v1888
      %v1905 = vmul.f32 %v230, %v1889
      %v1906 = vmul.f32 %v231, %v1890
      %v1907 = vmul.f32 %v232, %v1891
      %v1908 = vmul.f32 %v233, %v1892
      %v1909 = vmul.f32 %v234, %v1893
      %v1910 = vmul.f32 %v235, %v1894
      %v1911 = vmul.f32 %v236, %v1895
      %v1912 = vmul.f32 %v237, %v1896
      %v1913 = vmul.f32 %v238, %v1897
      %v1914 = vmul.f32 %v239, %v1898
      %v1915 = vmul.f32 %v240, %v1899
      %1916 = vst [vmem:[%s224] sm:$0xff] %v1900
      %1917 = vst [vmem:[%s224 + $0x8] sm:$0xff] %v1901
      %1918 = vst [vmem:[%s224 + $0x10] sm:$0xff] %v1902
      %1919 = vst [vmem:[%s224 + $0x18] sm:$0xff] %v1903
      %1920 = vst [vmem:[%s224 + $0x20] sm:$0xff] %v1904
      %1921 = vst [vmem:[%s224 + $0x28] sm:$0xff] %v1905
      %1922 = vst [vmem:[%s224 + $0x30] sm:$0xff] %v1906
      %1923 = vst [vmem:[%s224 + $0x38] sm:$0xff] %v1907
      %1924 = vst [vmem:[%s224 + $0x40] sm:$0xff] %v1908
      %1925 = vst [vmem:[%s224 + $0x48] sm:$0xff] %v1909
      %1926 = vst [vmem:[%s224 + $0x50] sm:$0xff] %v1910
      %1927 = vst [vmem:[%s224 + $0x58] sm:$0xff] %v1911
      %1928 = vst [vmem:[%s224 + $0x60] sm:$0xff] %v1912
      %1929 = vst [vmem:[%s224 + $0x68] sm:$0xff] %v1913
      %1930 = vst [vmem:[%s224 + $0x70] sm:$0xff] %v1914
      %1931 = vst [vmem:[%s224 + $0x78] sm:$0xff] %v1915
      %p1932 = scmp.lt.s32.totalorder %s16, 1
      %s1933 = scalar_select %p1932, %s16, 1
      %s1934 = smul.addr %s1933, 16
      %s1935 = smul.addr %s1934, 8
      %s1936 = scalar_lea.vmem %s5, %s1935
      // Predicated region
      $region41: #{cbam3d.1} parent=39 // pred_check
        %p1937 = pneg %p144
      $region42: #{cbam3d.1} parent=39 // pred_check_branch
        %1939 = sbr.rel (%p1937) target = $region44
      $region43: #{cbam3d.1} parent=39 // pred_region
        _
      $region44: #{cbam3d.1} parent=39 // pred_fallthru
        _
    $region40: #{cbam3d.1} parent=5 // pred_fallthru
      _
    %p1940 = scmp.le.s32.totalorder 2, %s11
    // Predicated region
    $region45: #{cbam3d.1} parent=5 // pred_check
      %p1941 = pneg %p1940
    $region46: #{cbam3d.1} parent=5 // pred_check_branch
      %1943 = sbr.rel (%p1941) target = $region48
    $region47: #{cbam3d.1} parent=5 // pred_region
      %s1944 = ssub.s32 %s11, 2
      // Predicated region
      $region49: #{cbam3d.1} parent=47 // pred_check
        %p1945 = pneg %p150
      $region50: #{cbam3d.1} parent=47 // pred_check_branch
        %1947 = sbr.rel (%p1945) target = $region52
      $region51: #{cbam3d.1} parent=47 // pred_region
        %p1948 = scmp.lt.s32.totalorder %s17, 1
        %s1949 = scalar_select %p1948, %s17, 1
        %s1950 = smul.addr %s1949, 16
        %s1951 = smul.addr %s1950, 8
        %s1952 = scalar_lea.vmem %s5, %s1951
      $region52: #{cbam3d.1} parent=47 // pred_fallthru
        _
    $region48: #{cbam3d.1} parent=5 // pred_fallthru
      _
  $region6: #{cbam3d.1} parent=0 // loop_footer
    %s15 = sadd.s32 1, %s11
  $region7: #{cbam3d.1} parent=0 // loop_footer_branch
    %10 = sbr.rel target = $region3
  $region8: #{cbam3d.1} parent=0 // loop_exit
    _

</llo_original>
